<compile_context>
chip_gen: v7x
topology: tpu7x:2x2x1
jax: 0.10.0
libtpu: 0.0.40
codegen_flags: <defaults>
</compile_context>

<pallas_src>
import jax
import jax.numpy as jnp
from jax.experimental import pallas as pl
from jax.experimental.pallas import tpu as pltpu


def network_layer_kernel(x_ref, bias1_ref, w1g_t_ref, w1n_ref, w2s_t_ref, b2_ref,
                         o_ref):
    """One batch tile of TB elements, batch on the lane axis.

    x_ref     : [3, N, TB]   latent vectors, d-major / batch-last
    bias1_ref : [H, TB]      (u @ W1_u + b1)^T  (globals term hoisted to the wrapper)
    w1g_t_ref : [H, N]       W1 gram rows, transposed
    w1n_ref   : [H, 1]       W1 |x| row, transposed
    w2s_t_ref : [K, H]       (W2 / N)^T  (pooling mean folded in)
    b2_ref    : [K, 1]
    o_ref     : [3, K, TB]   pooled output (wrapper transposes to [B, K, 3])
    """
    _, N, TB = x_ref.shape
    H = w1g_t_ref.shape[0]
    K = w2s_t_ref.shape[0]

    x = x_ref[...]                                           # [3, N, TB]
    bias1 = bias1_ref[...]                                   # [H, TB]
    w1g_t = w1g_t_ref[...]                                   # [H, N]
    w2s_t = w2s_t_ref[...]                                   # [K, H]
    b2 = b2_ref[...]                                         # [K, 1]

    # |x| + 1e-5  per (n, b); lane-dense [N, TB] blocks.
    xsq = x * x
    x_norm = jnp.sqrt(xsq[0] + xsq[1] + xsq[2]) + 1e-5       # [N, TB]

    # Gram associativity:  (x x^T) W1g == x (x^T W1g)
    # tmp_d[h, b] = sum_m W1g[m, h] * x[b, m, d]  -> three small MXU matmuls, B on lanes.
    tmp = [jnp.dot(w1g_t, x[d], preferred_element_type=jnp.float32)  # [H, TB]
           for d in range(3)]
    # rank-1 |x| row of W1: lane-broadcast once, reused inside the n-loop.
    w1n_b = jnp.broadcast_to(w1n_ref[...], (H, TB))          # [H, TB]

    # Per-n processing: largest live tensor is [H, TB]; g_d accumulates the
    # x-weighted post-activation so layer 2 can be applied AFTER pooling.
    g = [jnp.zeros((H, TB), jnp.float32) for _ in range(3)]
    xs = [x[d, 0:1, :] for d in range(3)]                    # running sum_n x -> [1, TB]
    for n in range(N):                                       # static unroll, N is small
        a = [jnp.broadcast_to(x[d, n:n + 1, :], (H, TB)) for d in range(3)]
        an = jnp.broadcast_to(x_norm[n:n + 1, :], (H, TB))
        hn = a[0] * tmp[0] + a[1] * tmp[1] + a[2] * tmp[2] + an * w1n_b + bias1
        hn = jnp.maximum(hn, 0.01 * hn)                      # LeakyReLU(0.01)
        for d in range(3):
            g[d] = g[d] + a[d] * hn
        if n > 0:
            for d in range(3):
                xs[d] = xs[d] + x[d, n:n + 1, :]

    inv_n = 1.0 / N
    for d in range(3):
        # layer 2 (with 1/N folded into the weights) applied to the pooled activations.
        od = jnp.dot(w2s_t, g[d], preferred_element_type=jnp.float32)   # [K, TB]
        # b2 term pushed through the linear pool: b2 (x) mean_n(x).
        od = od + b2 * (xs[d] * inv_n)                                   # [K,1]*[1,TB]
        o_ref[d] = od.astype(o_ref.dtype)


def network_layer_forward(x, u, W1, b1, W2, b2, *, block_b=512):
    """x: [B, N, 3], u: [B, Ng], W1: [1+N+Ng, H], b1: [H], W2: [H, K], b2: [K].

    block_b: batch-tile size. When B > block_b it must be a multiple of 128 (batch
             lives on the lane axis); sweep 256/512/1024 for large B.
    """
    B, N, D = x.shape
    Ng = u.shape[-1]
    Din, H = W1.shape
    K = W2.shape[-1]
    assert D == 3 and Din == 1 + N + Ng

    # ---- weight prep (tiny, wrapper-side, done once) --------------------------------
    w1n_col = jnp.transpose(W1[0:1, :])                      # [H, 1]   |x| row
    w1g_t = jnp.transpose(W1[1:1 + N, :])                    # [H, N]   gram rows
    w1_u = W1[1 + N:, :]                                     # [Ng, H]  globals rows
    w2s_t = jnp.transpose(W2) * (1.0 / N)                    # [K, H]   1/N pool folded in
    b2_col = b2.reshape(K, 1)                                # [K, 1]

    # globals + layer-1 bias hoisted out of the kernel; batch-last layout.
    bias1_bl = jnp.transpose(u @ w1_u + b1[None, :])         # [H, B]
    # single layout transform of x for the B-last kernel (no duplicate x/x^T inputs).
    x_bl = jnp.transpose(x, (2, 1, 0))                       # [3, N, B]

    if B > block_b:
        if block_b % 128 != 0:
            raise ValueError("block_b must be a multiple of 128 when tiling the batch")
        TB = block_b
    else:
        TB = B                                               # single full-extent block
    grid = (pl.cdiv(B, TB),)                                 # partial last block is masked

    grid_spec = pltpu.PrefetchScalarGridSpec(
        num_scalar_prefetch=0,
        grid=grid,
        in_specs=[
            pl.BlockSpec((3, N, TB), lambda b: (0, 0, b)),   # x (B-last)
            pl.BlockSpec((H, TB), lambda b: (0, b)),         # (u @ W1_u + b1)^T
            pl.BlockSpec((H, N), lambda b: (0, 0)),          # W1 gram rows ^T
            pl.BlockSpec((H, 1), lambda b: (0, 0)),          # W1 |x| row ^T
            pl.BlockSpec((K, H), lambda b: (0, 0)),          # (W2/N)^T
            pl.BlockSpec((K, 1), lambda b: (0, 0)),          # b2
        ],
        out_specs=pl.BlockSpec((3, K, TB), lambda b: (0, 0, b)),
    )

    out = pl.pallas_call(
        network_layer_kernel,
        out_shape=jax.ShapeDtypeStruct((3, K, B), jnp.float32),
        grid_spec=grid_spec,
        compiler_params=pltpu.CompilerParams(dimension_semantics=("parallel",)),
    )(x_bl, bias1_bl, w1g_t, w1n_col, w2s_t, b2_col)

    # [3, K, B] -> [B, K, 3]
    return jnp.transpose(out, (2, 1, 0))


def reference_forward(x, u, W1, b1, W2, b2):
    """Pure-JAX reference mirroring the PyTorch forward (latent branch)."""
    x_norm = jnp.linalg.norm(x, axis=-1, keepdims=True) + 1e-5
    gram = jnp.einsum('bid,bjd->bij', x, x)
    u_b = jnp.broadcast_to(u[:, None, :], (x.shape[0], x.shape[1], u.shape[-1]))
    scalars = jnp.concatenate([x_norm, gram, u_b], axis=-1)
    h = scalars @ W1 + b1
    h = jnp.where(h > 0, h, 0.01 * h)
    fk = h @ W2 + b2
    vecs = jnp.einsum('bio,bid->biod', fk, x)
    return jnp.mean(vecs, axis=1)


if __name__ == "__main__":
    # small, deterministic shapes consistent with the module
    K_IN = 8       # Nvecs == k_in (latent layer)
    NG = 4         # len(GlobalFields)
    HIDDEN = 32    # MLP hidden width
    K_OUT = 8      # k_out
    D_IN = 1 + K_IN + NG   # |x| + x.x gram + globals

    key = jax.random.PRNGKey(0)
    kx, ku, kw1, kb1, kw2, kb2, kx2, ku2 = jax.random.split(key, 8)

    W1 = jax.random.normal(kw1, (D_IN, HIDDEN), dtype=jnp.float32) * 0.1
    b1 = jax.random.normal(kb1, (HIDDEN,), dtype=jnp.float32) * 0.01
    W2 = jax.random.normal(kw2, (HIDDEN, K_OUT), dtype=jnp.float32) * 0.1
    b2 = jax.random.normal(kb2, (K_OUT,), dtype=jnp.float32) * 0.01

    # --- test 1: tiny batch, single grid step (block = full batch extent) ----------
    B = 2
    x = jax.random.normal(kx, (B, K_IN, 3), dtype=jnp.float32) * 0.5
    u = jax.random.normal(ku, (B, NG), dtype=jnp.float32)

    out = network_layer_forward(x, u, W1, b1, W2, b2)
    out = jax.block_until_ready(out)
    ref = reference_forward(x, u, W1, b1, W2, b2)
    assert out.shape == (B, K_OUT, 3), out.shape
    assert jnp.allclose(out, ref, atol=1e-4, rtol=1e-4), \
        float(jnp.max(jnp.abs(out - ref)))

    # --- test 2: multiple grid steps + masked partial last block --------------------
    B2 = 300   # 2 full 128-wide tiles + one partial tile of 44 columns
    x2 = jax.random.normal(kx2, (B2, K_IN, 3), dtype=jnp.float32) * 0.5
    u2 = jax.random.normal(ku2, (B2, NG), dtype=jnp.float32)

    out2 = network_layer_forward(x2, u2, W1, b1, W2, b2, block_b=128)
    out2 = jax.block_until_ready(out2)
    ref2 = reference_forward(x2, u2, W1, b1, W2, b2)
    assert out2.shape == (B2, K_OUT, 3), out2.shape
    assert jnp.allclose(out2, ref2, atol=1e-4, rtol=1e-4), \
        float(jnp.max(jnp.abs(out2 - ref2)))

    print("KERNEL_OK")
</pallas_src>

<mosaic_0001>
module attributes {stable_mosaic.version = 11 : i64} {
  func.func @network_layer_kernel(%arg0: i32, %arg1: memref<3x8x2xf32, #tpu.memory_space<vmem>>, %arg2: memref<32x2xf32, #tpu.memory_space<vmem>>, %arg3: memref<32x8xf32, #tpu.memory_space<vmem>>, %arg4: memref<32x1xf32, #tpu.memory_space<vmem>>, %arg5: memref<8x32xf32, #tpu.memory_space<vmem>>, %arg6: memref<8x1xf32, #tpu.memory_space<vmem>>, %arg7: memref<3x8x2xf32, #tpu.memory_space<vmem>>) attributes {dimension_semantics = [#tpu.dimension_semantics<parallel>], iteration_bounds = array<i64: 1>, scalar_prefetch = 0 : i64, scratch_operands = 0 : i64, tpu.core_type = #tpu.core_type<tc>, window_params = [{transform_indices = @transform_0, window_bounds = array<i64: 3, 8, 2>}, {transform_indices = @transform_1, window_bounds = array<i64: 32, 2>}, {pipeline_mode = #tpu.pipeline_mode<synchronous>, transform_indices = @transform_2, window_bounds = array<i64: 32, 8>}, {pipeline_mode = #tpu.pipeline_mode<synchronous>, transform_indices = @transform_3, window_bounds = array<i64: 32, 1>}, {pipeline_mode = #tpu.pipeline_mode<synchronous>, transform_indices = @transform_4, window_bounds = array<i64: 8, 32>}, {pipeline_mode = #tpu.pipeline_mode<synchronous>, transform_indices = @transform_5, window_bounds = array<i64: 8, 1>}, {transform_indices = @transform_6, window_bounds = array<i64: 3, 8, 2>}]} {
    %c0 = arith.constant 0 : index
    %c0_0 = arith.constant 0 : index
    %c0_1 = arith.constant 0 : index
    %0 = vector.load %arg1[%c0, %c0_0, %c0_1] : memref<3x8x2xf32, #tpu.memory_space<vmem>>, vector<3x8x2xf32>
    %c0_2 = arith.constant 0 : index
    %c0_3 = arith.constant 0 : index
    %1 = vector.load %arg2[%c0_2, %c0_3] : memref<32x2xf32, #tpu.memory_space<vmem>>, vector<32x2xf32>
    %c0_4 = arith.constant 0 : index
    %c0_5 = arith.constant 0 : index
    %2 = vector.load %arg3[%c0_4, %c0_5] : memref<32x8xf32, #tpu.memory_space<vmem>>, vector<32x8xf32>
    %c0_6 = arith.constant 0 : index
    %c0_7 = arith.constant 0 : index
    %3 = vector.load %arg5[%c0_6, %c0_7] : memref<8x32xf32, #tpu.memory_space<vmem>>, vector<8x32xf32>
    %c0_8 = arith.constant 0 : index
    %c0_9 = arith.constant 0 : index
    %4 = vector.load %arg6[%c0_8, %c0_9] : memref<8x1xf32, #tpu.memory_space<vmem>>, vector<8x1xf32>
    %5 = arith.mulf %0, %0 : vector<3x8x2xf32>
    %6 = vector.extract_strided_slice %5 {offsets = [0, 0, 0], sizes = [1, 8, 2], strides = [1, 1, 1]} : vector<3x8x2xf32> to vector<1x8x2xf32>
    %7 = vector.shape_cast %6 : vector<1x8x2xf32> to vector<8x2xf32>
    %8 = vector.extract_strided_slice %5 {offsets = [1, 0, 0], sizes = [1, 8, 2], strides = [1, 1, 1]} : vector<3x8x2xf32> to vector<1x8x2xf32>
    %9 = vector.shape_cast %8 : vector<1x8x2xf32> to vector<8x2xf32>
    %10 = arith.addf %7, %9 : vector<8x2xf32>
    %11 = vector.extract_strided_slice %5 {offsets = [2, 0, 0], sizes = [1, 8, 2], strides = [1, 1, 1]} : vector<3x8x2xf32> to vector<1x8x2xf32>
    %12 = vector.shape_cast %11 : vector<1x8x2xf32> to vector<8x2xf32>
    %13 = arith.addf %10, %12 : vector<8x2xf32>
    %14 = math.sqrt %13 : vector<8x2xf32>
    %cst = arith.constant 9.99999974E-6 : f32
    %15 = vector.broadcast %cst : f32 to vector<8x2xf32>
    %16 = arith.addf %14, %15 : vector<8x2xf32>
    %17 = vector.extract_strided_slice %0 {offsets = [0, 0, 0], sizes = [1, 8, 2], strides = [1, 1, 1]} : vector<3x8x2xf32> to vector<1x8x2xf32>
    %18 = vector.shape_cast %17 : vector<1x8x2xf32> to vector<8x2xf32>
    %cst_10 = arith.constant dense<0.000000e+00> : vector<32x2xf32>
    %19 = tpu.matmul %2, %18, %cst_10 {dimension_numbers = #tpu.dot_dimension_numbers<[1], [0], [0], [1], [0, 0, 1, 1], [], []>} : vector<32x8xf32>, vector<8x2xf32>, vector<32x2xf32> -> vector<32x2xf32>
    %20 = vector.extract_strided_slice %0 {offsets = [1, 0, 0], sizes = [1, 8, 2], strides = [1, 1, 1]} : vector<3x8x2xf32> to vector<1x8x2xf32>
    %21 = vector.shape_cast %20 : vector<1x8x2xf32> to vector<8x2xf32>
    %cst_11 = arith.constant dense<0.000000e+00> : vector<32x2xf32>
    %22 = tpu.matmul %2, %21, %cst_11 {dimension_numbers = #tpu.dot_dimension_numbers<[1], [0], [0], [1], [0, 0, 1, 1], [], []>} : vector<32x8xf32>, vector<8x2xf32>, vector<32x2xf32> -> vector<32x2xf32>
    %23 = vector.extract_strided_slice %0 {offsets = [2, 0, 0], sizes = [1, 8, 2], strides = [1, 1, 1]} : vector<3x8x2xf32> to vector<1x8x2xf32>
    %24 = vector.shape_cast %23 : vector<1x8x2xf32> to vector<8x2xf32>
    %cst_12 = arith.constant dense<0.000000e+00> : vector<32x2xf32>
    %25 = tpu.matmul %2, %24, %cst_12 {dimension_numbers = #tpu.dot_dimension_numbers<[1], [0], [0], [1], [0, 0, 1, 1], [], []>} : vector<32x8xf32>, vector<8x2xf32>, vector<32x2xf32> -> vector<32x2xf32>
    %c0_13 = arith.constant 0 : index
    %c0_14 = arith.constant 0 : index
    %26 = vector.load %arg4[%c0_13, %c0_14] : memref<32x1xf32, #tpu.memory_space<vmem>>, vector<32x1xf32>
    %27 = vector.shape_cast %26 : vector<32x1xf32> to vector<32x1xf32>
    %28 = vector.broadcast %27 : vector<32x1xf32> to vector<32x2xf32>
    %cst_15 = arith.constant 0.000000e+00 : f32
    %29 = vector.broadcast %cst_15 : f32 to vector<32x2xf32>
    %cst_16 = arith.constant 0.000000e+00 : f32
    %30 = vector.broadcast %cst_16 : f32 to vector<32x2xf32>
    %cst_17 = arith.constant 0.000000e+00 : f32
    %31 = vector.broadcast %cst_17 : f32 to vector<32x2xf32>
    %32 = vector.extract_strided_slice %0 {offsets = [0, 0, 0], sizes = [1, 1, 2], strides = [1, 1, 1]} : vector<3x8x2xf32> to vector<1x1x2xf32>
    %33 = vector.shape_cast %32 : vector<1x1x2xf32> to vector<1x2xf32>
    %34 = vector.extract_strided_slice %0 {offsets = [1, 0, 0], sizes = [1, 1, 2], strides = [1, 1, 1]} : vector<3x8x2xf32> to vector<1x1x2xf32>
    %35 = vector.shape_cast %34 : vector<1x1x2xf32> to vector<1x2xf32>
    %36 = vector.extract_strided_slice %0 {offsets = [2, 0, 0], sizes = [1, 1, 2], strides = [1, 1, 1]} : vector<3x8x2xf32> to vector<1x1x2xf32>
    %37 = vector.shape_cast %36 : vector<1x1x2xf32> to vector<1x2xf32>
    %38 = vector.extract_strided_slice %0 {offsets = [0, 0, 0], sizes = [1, 1, 2], strides = [1, 1, 1]} : vector<3x8x2xf32> to vector<1x1x2xf32>
    %39 = vector.shape_cast %38 : vector<1x1x2xf32> to vector<1x2xf32>
    %40 = vector.shape_cast %39 : vector<1x2xf32> to vector<1x2xf32>
    %41 = vector.broadcast %40 : vector<1x2xf32> to vector<32x2xf32>
    %42 = vector.extract_strided_slice %0 {offsets = [1, 0, 0], sizes = [1, 1, 2], strides = [1, 1, 1]} : vector<3x8x2xf32> to vector<1x1x2xf32>
    %43 = vector.shape_cast %42 : vector<1x1x2xf32> to vector<1x2xf32>
    %44 = vector.shape_cast %43 : vector<1x2xf32> to vector<1x2xf32>
    %45 = vector.broadcast %44 : vector<1x2xf32> to vector<32x2xf32>
    %46 = vector.extract_strided_slice %0 {offsets = [2, 0, 0], sizes = [1, 1, 2], strides = [1, 1, 1]} : vector<3x8x2xf32> to vector<1x1x2xf32>
    %47 = vector.shape_cast %46 : vector<1x1x2xf32> to vector<1x2xf32>
    %48 = vector.shape_cast %47 : vector<1x2xf32> to vector<1x2xf32>
    %49 = vector.broadcast %48 : vector<1x2xf32> to vector<32x2xf32>
    %50 = vector.extract_strided_slice %16 {offsets = [0, 0], sizes = [1, 2], strides = [1, 1]} : vector<8x2xf32> to vector<1x2xf32>
    %51 = vector.shape_cast %50 : vector<1x2xf32> to vector<1x2xf32>
    %52 = vector.broadcast %51 : vector<1x2xf32> to vector<32x2xf32>
    %53 = arith.mulf %41, %19 : vector<32x2xf32>
    %54 = arith.mulf %45, %22 : vector<32x2xf32>
    %55 = arith.addf %53, %54 : vector<32x2xf32>
    %56 = arith.mulf %49, %25 : vector<32x2xf32>
    %57 = arith.addf %55, %56 : vector<32x2xf32>
    %58 = arith.mulf %52, %28 : vector<32x2xf32>
    %59 = arith.addf %57, %58 : vector<32x2xf32>
    %60 = arith.addf %59, %1 : vector<32x2xf32>
    %cst_18 = arith.constant 0.00999999977 : f32
    %61 = vector.broadcast %cst_18 : f32 to vector<32x2xf32>
    %62 = arith.mulf %61, %60 : vector<32x2xf32>
    %63 = arith.maximumf %60, %62 : vector<32x2xf32>
    %64 = arith.mulf %41, %63 : vector<32x2xf32>
    %65 = arith.addf %29, %64 : vector<32x2xf32>
    %66 = arith.mulf %45, %63 : vector<32x2xf32>
    %67 = arith.addf %30, %66 : vector<32x2xf32>
    %68 = arith.mulf %49, %63 : vector<32x2xf32>
    %69 = arith.addf %31, %68 : vector<32x2xf32>
    %70 = vector.extract_strided_slice %0 {offsets = [0, 1, 0], sizes = [1, 1, 2], strides = [1, 1, 1]} : vector<3x8x2xf32> to vector<1x1x2xf32>
    %71 = vector.shape_cast %70 : vector<1x1x2xf32> to vector<1x2xf32>
    %72 = vector.shape_cast %71 : vector<1x2xf32> to vector<1x2xf32>
    %73 = vector.broadcast %72 : vector<1x2xf32> to vector<32x2xf32>
    %74 = vector.extract_strided_slice %0 {offsets = [1, 1, 0], sizes = [1, 1, 2], strides = [1, 1, 1]} : vector<3x8x2xf32> to vector<1x1x2xf32>
    %75 = vector.shape_cast %74 : vector<1x1x2xf32> to vector<1x2xf32>
    %76 = vector.shape_cast %75 : vector<1x2xf32> to vector<1x2xf32>
    %77 = vector.broadcast %76 : vector<1x2xf32> to vector<32x2xf32>
    %78 = vector.extract_strided_slice %0 {offsets = [2, 1, 0], sizes = [1, 1, 2], strides = [1, 1, 1]} : vector<3x8x2xf32> to vector<1x1x2xf32>
    %79 = vector.shape_cast %78 : vector<1x1x2xf32> to vector<1x2xf32>
    %80 = vector.shape_cast %79 : vector<1x2xf32> to vector<1x2xf32>
    %81 = vector.broadcast %80 : vector<1x2xf32> to vector<32x2xf32>
    %82 = vector.extract_strided_slice %16 {offsets = [1, 0], sizes = [1, 2], strides = [1, 1]} : vector<8x2xf32> to vector<1x2xf32>
    %83 = vector.shape_cast %82 : vector<1x2xf32> to vector<1x2xf32>
    %84 = vector.broadcast %83 : vector<1x2xf32> to vector<32x2xf32>
    %85 = arith.mulf %73, %19 : vector<32x2xf32>
    %86 = arith.mulf %77, %22 : vector<32x2xf32>
    %87 = arith.addf %85, %86 : vector<32x2xf32>
    %88 = arith.mulf %81, %25 : vector<32x2xf32>
    %89 = arith.addf %87, %88 : vector<32x2xf32>
    %90 = arith.mulf %84, %28 : vector<32x2xf32>
    %91 = arith.addf %89, %90 : vector<32x2xf32>
    %92 = arith.addf %91, %1 : vector<32x2xf32>
    %cst_19 = arith.constant 0.00999999977 : f32
    %93 = vector.broadcast %cst_19 : f32 to vector<32x2xf32>
    %94 = arith.mulf %93, %92 : vector<32x2xf32>
    %95 = arith.maximumf %92, %94 : vector<32x2xf32>
    %96 = arith.mulf %73, %95 : vector<32x2xf32>
    %97 = arith.addf %65, %96 : vector<32x2xf32>
    %98 = arith.mulf %77, %95 : vector<32x2xf32>
    %99 = arith.addf %67, %98 : vector<32x2xf32>
    %100 = arith.mulf %81, %95 : vector<32x2xf32>
    %101 = arith.addf %69, %100 : vector<32x2xf32>
    %102 = vector.extract_strided_slice %0 {offsets = [0, 1, 0], sizes = [1, 1, 2], strides = [1, 1, 1]} : vector<3x8x2xf32> to vector<1x1x2xf32>
    %103 = vector.shape_cast %102 : vector<1x1x2xf32> to vector<1x2xf32>
    %104 = arith.addf %33, %103 : vector<1x2xf32>
    %105 = vector.extract_strided_slice %0 {offsets = [1, 1, 0], sizes = [1, 1, 2], strides = [1, 1, 1]} : vector<3x8x2xf32> to vector<1x1x2xf32>
    %106 = vector.shape_cast %105 : vector<1x1x2xf32> to vector<1x2xf32>
    %107 = arith.addf %35, %106 : vector<1x2xf32>
    %108 = vector.extract_strided_slice %0 {offsets = [2, 1, 0], sizes = [1, 1, 2], strides = [1, 1, 1]} : vector<3x8x2xf32> to vector<1x1x2xf32>
    %109 = vector.shape_cast %108 : vector<1x1x2xf32> to vector<1x2xf32>
    %110 = arith.addf %37, %109 : vector<1x2xf32>
    %111 = vector.extract_strided_slice %0 {offsets = [0, 2, 0], sizes = [1, 1, 2], strides = [1, 1, 1]} : vector<3x8x2xf32> to vector<1x1x2xf32>
    %112 = vector.shape_cast %111 : vector<1x1x2xf32> to vector<1x2xf32>
    %113 = vector.shape_cast %112 : vector<1x2xf32> to vector<1x2xf32>
    %114 = vector.broadcast %113 : vector<1x2xf32> to vector<32x2xf32>
    %115 = vector.extract_strided_slice %0 {offsets = [1, 2, 0], sizes = [1, 1, 2], strides = [1, 1, 1]} : vector<3x8x2xf32> to vector<1x1x2xf32>
    %116 = vector.shape_cast %115 : vector<1x1x2xf32> to vector<1x2xf32>
    %117 = vector.shape_cast %116 : vector<1x2xf32> to vector<1x2xf32>
    %118 = vector.broadcast %117 : vector<1x2xf32> to vector<32x2xf32>
    %119 = vector.extract_strided_slice %0 {offsets = [2, 2, 0], sizes = [1, 1, 2], strides = [1, 1, 1]} : vector<3x8x2xf32> to vector<1x1x2xf32>
    %120 = vector.shape_cast %119 : vector<1x1x2xf32> to vector<1x2xf32>
    %121 = vector.shape_cast %120 : vector<1x2xf32> to vector<1x2xf32>
    %122 = vector.broadcast %121 : vector<1x2xf32> to vector<32x2xf32>
    %123 = vector.extract_strided_slice %16 {offsets = [2, 0], sizes = [1, 2], strides = [1, 1]} : vector<8x2xf32> to vector<1x2xf32>
    %124 = vector.shape_cast %123 : vector<1x2xf32> to vector<1x2xf32>
    %125 = vector.broadcast %124 : vector<1x2xf32> to vector<32x2xf32>
    %126 = arith.mulf %114, %19 : vector<32x2xf32>
    %127 = arith.mulf %118, %22 : vector<32x2xf32>
    %128 = arith.addf %126, %127 : vector<32x2xf32>
    %129 = arith.mulf %122, %25 : vector<32x2xf32>
    %130 = arith.addf %128, %129 : vector<32x2xf32>
    %131 = arith.mulf %125, %28 : vector<32x2xf32>
    %132 = arith.addf %130, %131 : vector<32x2xf32>
    %133 = arith.addf %132, %1 : vector<32x2xf32>
    %cst_20 = arith.constant 0.00999999977 : f32
    %134 = vector.broadcast %cst_20 : f32 to vector<32x2xf32>
    %135 = arith.mulf %134, %133 : vector<32x2xf32>
    %136 = arith.maximumf %133, %135 : vector<32x2xf32>
    %137 = arith.mulf %114, %136 : vector<32x2xf32>
    %138 = arith.addf %97, %137 : vector<32x2xf32>
    %139 = arith.mulf %118, %136 : vector<32x2xf32>
    %140 = arith.addf %99, %139 : vector<32x2xf32>
    %141 = arith.mulf %122, %136 : vector<32x2xf32>
    %142 = arith.addf %101, %141 : vector<32x2xf32>
    %143 = vector.extract_strided_slice %0 {offsets = [0, 2, 0], sizes = [1, 1, 2], strides = [1, 1, 1]} : vector<3x8x2xf32> to vector<1x1x2xf32>
    %144 = vector.shape_cast %143 : vector<1x1x2xf32> to vector<1x2xf32>
    %145 = arith.addf %104, %144 : vector<1x2xf32>
    %146 = vector.extract_strided_slice %0 {offsets = [1, 2, 0], sizes = [1, 1, 2], strides = [1, 1, 1]} : vector<3x8x2xf32> to vector<1x1x2xf32>
    %147 = vector.shape_cast %146 : vector<1x1x2xf32> to vector<1x2xf32>
    %148 = arith.addf %107, %147 : vector<1x2xf32>
    %149 = vector.extract_strided_slice %0 {offsets = [2, 2, 0], sizes = [1, 1, 2], strides = [1, 1, 1]} : vector<3x8x2xf32> to vector<1x1x2xf32>
    %150 = vector.shape_cast %149 : vector<1x1x2xf32> to vector<1x2xf32>
    %151 = arith.addf %110, %150 : vector<1x2xf32>
    %152 = vector.extract_strided_slice %0 {offsets = [0, 3, 0], sizes = [1, 1, 2], strides = [1, 1, 1]} : vector<3x8x2xf32> to vector<1x1x2xf32>
    %153 = vector.shape_cast %152 : vector<1x1x2xf32> to vector<1x2xf32>
    %154 = vector.shape_cast %153 : vector<1x2xf32> to vector<1x2xf32>
    %155 = vector.broadcast %154 : vector<1x2xf32> to vector<32x2xf32>
    %156 = vector.extract_strided_slice %0 {offsets = [1, 3, 0], sizes = [1, 1, 2], strides = [1, 1, 1]} : vector<3x8x2xf32> to vector<1x1x2xf32>
    %157 = vector.shape_cast %156 : vector<1x1x2xf32> to vector<1x2xf32>
    %158 = vector.shape_cast %157 : vector<1x2xf32> to vector<1x2xf32>
    %159 = vector.broadcast %158 : vector<1x2xf32> to vector<32x2xf32>
    %160 = vector.extract_strided_slice %0 {offsets = [2, 3, 0], sizes = [1, 1, 2], strides = [1, 1, 1]} : vector<3x8x2xf32> to vector<1x1x2xf32>
    %161 = vector.shape_cast %160 : vector<1x1x2xf32> to vector<1x2xf32>
    %162 = vector.shape_cast %161 : vector<1x2xf32> to vector<1x2xf32>
    %163 = vector.broadcast %162 : vector<1x2xf32> to vector<32x2xf32>
    %164 = vector.extract_strided_slice %16 {offsets = [3, 0], sizes = [1, 2], strides = [1, 1]} : vector<8x2xf32> to vector<1x2xf32>
    %165 = vector.shape_cast %164 : vector<1x2xf32> to vector<1x2xf32>
    %166 = vector.broadcast %165 : vector<1x2xf32> to vector<32x2xf32>
    %167 = arith.mulf %155, %19 : vector<32x2xf32>
    %168 = arith.mulf %159, %22 : vector<32x2xf32>
    %169 = arith.addf %167, %168 : vector<32x2xf32>
    %170 = arith.mulf %163, %25 : vector<32x2xf32>
    %171 = arith.addf %169, %170 : vector<32x2xf32>
    %172 = arith.mulf %166, %28 : vector<32x2xf32>
    %173 = arith.addf %171, %172 : vector<32x2xf32>
    %174 = arith.addf %173, %1 : vector<32x2xf32>
    %cst_21 = arith.constant 0.00999999977 : f32
    %175 = vector.broadcast %cst_21 : f32 to vector<32x2xf32>
    %176 = arith.mulf %175, %174 : vector<32x2xf32>
    %177 = arith.maximumf %174, %176 : vector<32x2xf32>
    %178 = arith.mulf %155, %177 : vector<32x2xf32>
    %179 = arith.addf %138, %178 : vector<32x2xf32>
    %180 = arith.mulf %159, %177 : vector<32x2xf32>
    %181 = arith.addf %140, %180 : vector<32x2xf32>
    %182 = arith.mulf %163, %177 : vector<32x2xf32>
    %183 = arith.addf %142, %182 : vector<32x2xf32>
    %184 = vector.extract_strided_slice %0 {offsets = [0, 3, 0], sizes = [1, 1, 2], strides = [1, 1, 1]} : vector<3x8x2xf32> to vector<1x1x2xf32>
    %185 = vector.shape_cast %184 : vector<1x1x2xf32> to vector<1x2xf32>
    %186 = arith.addf %145, %185 : vector<1x2xf32>
    %187 = vector.extract_strided_slice %0 {offsets = [1, 3, 0], sizes = [1, 1, 2], strides = [1, 1, 1]} : vector<3x8x2xf32> to vector<1x1x2xf32>
    %188 = vector.shape_cast %187 : vector<1x1x2xf32> to vector<1x2xf32>
    %189 = arith.addf %148, %188 : vector<1x2xf32>
    %190 = vector.extract_strided_slice %0 {offsets = [2, 3, 0], sizes = [1, 1, 2], strides = [1, 1, 1]} : vector<3x8x2xf32> to vector<1x1x2xf32>
    %191 = vector.shape_cast %190 : vector<1x1x2xf32> to vector<1x2xf32>
    %192 = arith.addf %151, %191 : vector<1x2xf32>
    %193 = vector.extract_strided_slice %0 {offsets = [0, 4, 0], sizes = [1, 1, 2], strides = [1, 1, 1]} : vector<3x8x2xf32> to vector<1x1x2xf32>
    %194 = vector.shape_cast %193 : vector<1x1x2xf32> to vector<1x2xf32>
    %195 = vector.shape_cast %194 : vector<1x2xf32> to vector<1x2xf32>
    %196 = vector.broadcast %195 : vector<1x2xf32> to vector<32x2xf32>
    %197 = vector.extract_strided_slice %0 {offsets = [1, 4, 0], sizes = [1, 1, 2], strides = [1, 1, 1]} : vector<3x8x2xf32> to vector<1x1x2xf32>
    %198 = vector.shape_cast %197 : vector<1x1x2xf32> to vector<1x2xf32>
    %199 = vector.shape_cast %198 : vector<1x2xf32> to vector<1x2xf32>
    %200 = vector.broadcast %199 : vector<1x2xf32> to vector<32x2xf32>
    %201 = vector.extract_strided_slice %0 {offsets = [2, 4, 0], sizes = [1, 1, 2], strides = [1, 1, 1]} : vector<3x8x2xf32> to vector<1x1x2xf32>
    %202 = vector.shape_cast %201 : vector<1x1x2xf32> to vector<1x2xf32>
    %203 = vector.shape_cast %202 : vector<1x2xf32> to vector<1x2xf32>
    %204 = vector.broadcast %203 : vector<1x2xf32> to vector<32x2xf32>
    %205 = vector.extract_strided_slice %16 {offsets = [4, 0], sizes = [1, 2], strides = [1, 1]} : vector<8x2xf32> to vector<1x2xf32>
    %206 = vector.shape_cast %205 : vector<1x2xf32> to vector<1x2xf32>
    %207 = vector.broadcast %206 : vector<1x2xf32> to vector<32x2xf32>
    %208 = arith.mulf %196, %19 : vector<32x2xf32>
    %209 = arith.mulf %200, %22 : vector<32x2xf32>
    %210 = arith.addf %208, %209 : vector<32x2xf32>
    %211 = arith.mulf %204, %25 : vector<32x2xf32>
    %212 = arith.addf %210, %211 : vector<32x2xf32>
    %213 = arith.mulf %207, %28 : vector<32x2xf32>
    %214 = arith.addf %212, %213 : vector<32x2xf32>
    %215 = arith.addf %214, %1 : vector<32x2xf32>
    %cst_22 = arith.constant 0.00999999977 : f32
    %216 = vector.broadcast %cst_22 : f32 to vector<32x2xf32>
    %217 = arith.mulf %216, %215 : vector<32x2xf32>
    %218 = arith.maximumf %215, %217 : vector<32x2xf32>
    %219 = arith.mulf %196, %218 : vector<32x2xf32>
    %220 = arith.addf %179, %219 : vector<32x2xf32>
    %221 = arith.mulf %200, %218 : vector<32x2xf32>
    %222 = arith.addf %181, %221 : vector<32x2xf32>
    %223 = arith.mulf %204, %218 : vector<32x2xf32>
    %224 = arith.addf %183, %223 : vector<32x2xf32>
    %225 = vector.extract_strided_slice %0 {offsets = [0, 4, 0], sizes = [1, 1, 2], strides = [1, 1, 1]} : vector<3x8x2xf32> to vector<1x1x2xf32>
    %226 = vector.shape_cast %225 : vector<1x1x2xf32> to vector<1x2xf32>
    %227 = arith.addf %186, %226 : vector<1x2xf32>
    %228 = vector.extract_strided_slice %0 {offsets = [1, 4, 0], sizes = [1, 1, 2], strides = [1, 1, 1]} : vector<3x8x2xf32> to vector<1x1x2xf32>
    %229 = vector.shape_cast %228 : vector<1x1x2xf32> to vector<1x2xf32>
    %230 = arith.addf %189, %229 : vector<1x2xf32>
    %231 = vector.extract_strided_slice %0 {offsets = [2, 4, 0], sizes = [1, 1, 2], strides = [1, 1, 1]} : vector<3x8x2xf32> to vector<1x1x2xf32>
    %232 = vector.shape_cast %231 : vector<1x1x2xf32> to vector<1x2xf32>
    %233 = arith.addf %192, %232 : vector<1x2xf32>
    %234 = vector.extract_strided_slice %0 {offsets = [0, 5, 0], sizes = [1, 1, 2], strides = [1, 1, 1]} : vector<3x8x2xf32> to vector<1x1x2xf32>
    %235 = vector.shape_cast %234 : vector<1x1x2xf32> to vector<1x2xf32>
    %236 = vector.shape_cast %235 : vector<1x2xf32> to vector<1x2xf32>
    %237 = vector.broadcast %236 : vector<1x2xf32> to vector<32x2xf32>
    %238 = vector.extract_strided_slice %0 {offsets = [1, 5, 0], sizes = [1, 1, 2], strides = [1, 1, 1]} : vector<3x8x2xf32> to vector<1x1x2xf32>
    %239 = vector.shape_cast %238 : vector<1x1x2xf32> to vector<1x2xf32>
    %240 = vector.shape_cast %239 : vector<1x2xf32> to vector<1x2xf32>
    %241 = vector.broadcast %240 : vector<1x2xf32> to vector<32x2xf32>
    %242 = vector.extract_strided_slice %0 {offsets = [2, 5, 0], sizes = [1, 1, 2], strides = [1, 1, 1]} : vector<3x8x2xf32> to vector<1x1x2xf32>
    %243 = vector.shape_cast %242 : vector<1x1x2xf32> to vector<1x2xf32>
    %244 = vector.shape_cast %243 : vector<1x2xf32> to vector<1x2xf32>
    %245 = vector.broadcast %244 : vector<1x2xf32> to vector<32x2xf32>
    %246 = vector.extract_strided_slice %16 {offsets = [5, 0], sizes = [1, 2], strides = [1, 1]} : vector<8x2xf32> to vector<1x2xf32>
    %247 = vector.shape_cast %246 : vector<1x2xf32> to vector<1x2xf32>
    %248 = vector.broadcast %247 : vector<1x2xf32> to vector<32x2xf32>
    %249 = arith.mulf %237, %19 : vector<32x2xf32>
    %250 = arith.mulf %241, %22 : vector<32x2xf32>
    %251 = arith.addf %249, %250 : vector<32x2xf32>
    %252 = arith.mulf %245, %25 : vector<32x2xf32>
    %253 = arith.addf %251, %252 : vector<32x2xf32>
    %254 = arith.mulf %248, %28 : vector<32x2xf32>
    %255 = arith.addf %253, %254 : vector<32x2xf32>
    %256 = arith.addf %255, %1 : vector<32x2xf32>
    %cst_23 = arith.constant 0.00999999977 : f32
    %257 = vector.broadcast %cst_23 : f32 to vector<32x2xf32>
    %258 = arith.mulf %257, %256 : vector<32x2xf32>
    %259 = arith.maximumf %256, %258 : vector<32x2xf32>
    %260 = arith.mulf %237, %259 : vector<32x2xf32>
    %261 = arith.addf %220, %260 : vector<32x2xf32>
    %262 = arith.mulf %241, %259 : vector<32x2xf32>
    %263 = arith.addf %222, %262 : vector<32x2xf32>
    %264 = arith.mulf %245, %259 : vector<32x2xf32>
    %265 = arith.addf %224, %264 : vector<32x2xf32>
    %266 = vector.extract_strided_slice %0 {offsets = [0, 5, 0], sizes = [1, 1, 2], strides = [1, 1, 1]} : vector<3x8x2xf32> to vector<1x1x2xf32>
    %267 = vector.shape_cast %266 : vector<1x1x2xf32> to vector<1x2xf32>
    %268 = arith.addf %227, %267 : vector<1x2xf32>
    %269 = vector.extract_strided_slice %0 {offsets = [1, 5, 0], sizes = [1, 1, 2], strides = [1, 1, 1]} : vector<3x8x2xf32> to vector<1x1x2xf32>
    %270 = vector.shape_cast %269 : vector<1x1x2xf32> to vector<1x2xf32>
    %271 = arith.addf %230, %270 : vector<1x2xf32>
    %272 = vector.extract_strided_slice %0 {offsets = [2, 5, 0], sizes = [1, 1, 2], strides = [1, 1, 1]} : vector<3x8x2xf32> to vector<1x1x2xf32>
    %273 = vector.shape_cast %272 : vector<1x1x2xf32> to vector<1x2xf32>
    %274 = arith.addf %233, %273 : vector<1x2xf32>
    %275 = vector.extract_strided_slice %0 {offsets = [0, 6, 0], sizes = [1, 1, 2], strides = [1, 1, 1]} : vector<3x8x2xf32> to vector<1x1x2xf32>
    %276 = vector.shape_cast %275 : vector<1x1x2xf32> to vector<1x2xf32>
    %277 = vector.shape_cast %276 : vector<1x2xf32> to vector<1x2xf32>
    %278 = vector.broadcast %277 : vector<1x2xf32> to vector<32x2xf32>
    %279 = vector.extract_strided_slice %0 {offsets = [1, 6, 0], sizes = [1, 1, 2], strides = [1, 1, 1]} : vector<3x8x2xf32> to vector<1x1x2xf32>
    %280 = vector.shape_cast %279 : vector<1x1x2xf32> to vector<1x2xf32>
    %281 = vector.shape_cast %280 : vector<1x2xf32> to vector<1x2xf32>
    %282 = vector.broadcast %281 : vector<1x2xf32> to vector<32x2xf32>
    %283 = vector.extract_strided_slice %0 {offsets = [2, 6, 0], sizes = [1, 1, 2], strides = [1, 1, 1]} : vector<3x8x2xf32> to vector<1x1x2xf32>
    %284 = vector.shape_cast %283 : vector<1x1x2xf32> to vector<1x2xf32>
    %285 = vector.shape_cast %284 : vector<1x2xf32> to vector<1x2xf32>
    %286 = vector.broadcast %285 : vector<1x2xf32> to vector<32x2xf32>
    %287 = vector.extract_strided_slice %16 {offsets = [6, 0], sizes = [1, 2], strides = [1, 1]} : vector<8x2xf32> to vector<1x2xf32>
    %288 = vector.shape_cast %287 : vector<1x2xf32> to vector<1x2xf32>
    %289 = vector.broadcast %288 : vector<1x2xf32> to vector<32x2xf32>
    %290 = arith.mulf %278, %19 : vector<32x2xf32>
    %291 = arith.mulf %282, %22 : vector<32x2xf32>
    %292 = arith.addf %290, %291 : vector<32x2xf32>
    %293 = arith.mulf %286, %25 : vector<32x2xf32>
    %294 = arith.addf %292, %293 : vector<32x2xf32>
    %295 = arith.mulf %289, %28 : vector<32x2xf32>
    %296 = arith.addf %294, %295 : vector<32x2xf32>
    %297 = arith.addf %296, %1 : vector<32x2xf32>
    %cst_24 = arith.constant 0.00999999977 : f32
    %298 = vector.broadcast %cst_24 : f32 to vector<32x2xf32>
    %299 = arith.mulf %298, %297 : vector<32x2xf32>
    %300 = arith.maximumf %297, %299 : vector<32x2xf32>
    %301 = arith.mulf %278, %300 : vector<32x2xf32>
    %302 = arith.addf %261, %301 : vector<32x2xf32>
    %303 = arith.mulf %282, %300 : vector<32x2xf32>
    %304 = arith.addf %263, %303 : vector<32x2xf32>
    %305 = arith.mulf %286, %300 : vector<32x2xf32>
    %306 = arith.addf %265, %305 : vector<32x2xf32>
    %307 = vector.extract_strided_slice %0 {offsets = [0, 6, 0], sizes = [1, 1, 2], strides = [1, 1, 1]} : vector<3x8x2xf32> to vector<1x1x2xf32>
    %308 = vector.shape_cast %307 : vector<1x1x2xf32> to vector<1x2xf32>
    %309 = arith.addf %268, %308 : vector<1x2xf32>
    %310 = vector.extract_strided_slice %0 {offsets = [1, 6, 0], sizes = [1, 1, 2], strides = [1, 1, 1]} : vector<3x8x2xf32> to vector<1x1x2xf32>
    %311 = vector.shape_cast %310 : vector<1x1x2xf32> to vector<1x2xf32>
    %312 = arith.addf %271, %311 : vector<1x2xf32>
    %313 = vector.extract_strided_slice %0 {offsets = [2, 6, 0], sizes = [1, 1, 2], strides = [1, 1, 1]} : vector<3x8x2xf32> to vector<1x1x2xf32>
    %314 = vector.shape_cast %313 : vector<1x1x2xf32> to vector<1x2xf32>
    %315 = arith.addf %274, %314 : vector<1x2xf32>
    %316 = vector.extract_strided_slice %0 {offsets = [0, 7, 0], sizes = [1, 1, 2], strides = [1, 1, 1]} : vector<3x8x2xf32> to vector<1x1x2xf32>
    %317 = vector.shape_cast %316 : vector<1x1x2xf32> to vector<1x2xf32>
    %318 = vector.shape_cast %317 : vector<1x2xf32> to vector<1x2xf32>
    %319 = vector.broadcast %318 : vector<1x2xf32> to vector<32x2xf32>
    %320 = vector.extract_strided_slice %0 {offsets = [1, 7, 0], sizes = [1, 1, 2], strides = [1, 1, 1]} : vector<3x8x2xf32> to vector<1x1x2xf32>
    %321 = vector.shape_cast %320 : vector<1x1x2xf32> to vector<1x2xf32>
    %322 = vector.shape_cast %321 : vector<1x2xf32> to vector<1x2xf32>
    %323 = vector.broadcast %322 : vector<1x2xf32> to vector<32x2xf32>
    %324 = vector.extract_strided_slice %0 {offsets = [2, 7, 0], sizes = [1, 1, 2], strides = [1, 1, 1]} : vector<3x8x2xf32> to vector<1x1x2xf32>
    %325 = vector.shape_cast %324 : vector<1x1x2xf32> to vector<1x2xf32>
    %326 = vector.shape_cast %325 : vector<1x2xf32> to vector<1x2xf32>
    %327 = vector.broadcast %326 : vector<1x2xf32> to vector<32x2xf32>
    %328 = vector.extract_strided_slice %16 {offsets = [7, 0], sizes = [1, 2], strides = [1, 1]} : vector<8x2xf32> to vector<1x2xf32>
    %329 = vector.shape_cast %328 : vector<1x2xf32> to vector<1x2xf32>
    %330 = vector.broadcast %329 : vector<1x2xf32> to vector<32x2xf32>
    %331 = arith.mulf %319, %19 : vector<32x2xf32>
    %332 = arith.mulf %323, %22 : vector<32x2xf32>
    %333 = arith.addf %331, %332 : vector<32x2xf32>
    %334 = arith.mulf %327, %25 : vector<32x2xf32>
    %335 = arith.addf %333, %334 : vector<32x2xf32>
    %336 = arith.mulf %330, %28 : vector<32x2xf32>
    %337 = arith.addf %335, %336 : vector<32x2xf32>
    %338 = arith.addf %337, %1 : vector<32x2xf32>
    %cst_25 = arith.constant 0.00999999977 : f32
    %339 = vector.broadcast %cst_25 : f32 to vector<32x2xf32>
    %340 = arith.mulf %339, %338 : vector<32x2xf32>
    %341 = arith.maximumf %338, %340 : vector<32x2xf32>
    %342 = arith.mulf %319, %341 : vector<32x2xf32>
    %343 = arith.addf %302, %342 : vector<32x2xf32>
    %344 = arith.mulf %323, %341 : vector<32x2xf32>
    %345 = arith.addf %304, %344 : vector<32x2xf32>
    %346 = arith.mulf %327, %341 : vector<32x2xf32>
    %347 = arith.addf %306, %346 : vector<32x2xf32>
    %348 = vector.extract_strided_slice %0 {offsets = [0, 7, 0], sizes = [1, 1, 2], strides = [1, 1, 1]} : vector<3x8x2xf32> to vector<1x1x2xf32>
    %349 = vector.shape_cast %348 : vector<1x1x2xf32> to vector<1x2xf32>
    %350 = arith.addf %309, %349 : vector<1x2xf32>
    %351 = vector.extract_strided_slice %0 {offsets = [1, 7, 0], sizes = [1, 1, 2], strides = [1, 1, 1]} : vector<3x8x2xf32> to vector<1x1x2xf32>
    %352 = vector.shape_cast %351 : vector<1x1x2xf32> to vector<1x2xf32>
    %353 = arith.addf %312, %352 : vector<1x2xf32>
    %354 = vector.extract_strided_slice %0 {offsets = [2, 7, 0], sizes = [1, 1, 2], strides = [1, 1, 1]} : vector<3x8x2xf32> to vector<1x1x2xf32>
    %355 = vector.shape_cast %354 : vector<1x1x2xf32> to vector<1x2xf32>
    %356 = arith.addf %315, %355 : vector<1x2xf32>
    %cst_26 = arith.constant dense<0.000000e+00> : vector<8x2xf32>
    %357 = tpu.matmul %3, %343, %cst_26 {dimension_numbers = #tpu.dot_dimension_numbers<[1], [0], [0], [1], [0, 0, 1, 1], [], []>} : vector<8x32xf32>, vector<32x2xf32>, vector<8x2xf32> -> vector<8x2xf32>
    %cst_27 = arith.constant 1.250000e-01 : f32
    %358 = vector.broadcast %cst_27 : f32 to vector<1x2xf32>
    %359 = arith.mulf %350, %358 : vector<1x2xf32>
    %360 = vector.broadcast %4 : vector<8x1xf32> to vector<8x2xf32>
    %361 = vector.broadcast %359 : vector<1x2xf32> to vector<8x2xf32>
    %362 = arith.mulf %360, %361 : vector<8x2xf32>
    %363 = arith.addf %357, %362 : vector<8x2xf32>
    %c0_28 = arith.constant 0 : index
    %c0_29 = arith.constant 0 : index
    %c0_30 = arith.constant 0 : index
    %364 = vector.load %arg7[%c0_28, %c0_29, %c0_30] : memref<3x8x2xf32, #tpu.memory_space<vmem>>, vector<1x8x2xf32>
    %365 = vector.shape_cast %364 : vector<1x8x2xf32> to vector<8x2xf32>
    %366 = vector.shape_cast %363 : vector<8x2xf32> to vector<1x8x2xf32>
    tpu.vector_store %arg7[%c0_28, %c0_29, %c0_30], %366 {strides = array<i32>} : memref<3x8x2xf32, #tpu.memory_space<vmem>>, vector<1x8x2xf32>,
    %cst_31 = arith.constant dense<0.000000e+00> : vector<8x2xf32>
    %367 = tpu.matmul %3, %345, %cst_31 {dimension_numbers = #tpu.dot_dimension_numbers<[1], [0], [0], [1], [0, 0, 1, 1], [], []>} : vector<8x32xf32>, vector<32x2xf32>, vector<8x2xf32> -> vector<8x2xf32>
    %cst_32 = arith.constant 1.250000e-01 : f32
    %368 = vector.broadcast %cst_32 : f32 to vector<1x2xf32>
    %369 = arith.mulf %353, %368 : vector<1x2xf32>
    %370 = vector.broadcast %4 : vector<8x1xf32> to vector<8x2xf32>
    %371 = vector.broadcast %369 : vector<1x2xf32> to vector<8x2xf32>
    %372 = arith.mulf %370, %371 : vector<8x2xf32>
    %373 = arith.addf %367, %372 : vector<8x2xf32>
    %c1 = arith.constant 1 : index
    %c0_33 = arith.constant 0 : index
    %c0_34 = arith.constant 0 : index
    %374 = vector.load %arg7[%c1, %c0_33, %c0_34] : memref<3x8x2xf32, #tpu.memory_space<vmem>>, vector<1x8x2xf32>
    %375 = vector.shape_cast %374 : vector<1x8x2xf32> to vector<8x2xf32>
    %376 = vector.shape_cast %373 : vector<8x2xf32> to vector<1x8x2xf32>
    tpu.vector_store %arg7[%c1, %c0_33, %c0_34], %376 {strides = array<i32>} : memref<3x8x2xf32, #tpu.memory_space<vmem>>, vector<1x8x2xf32>,
    %cst_35 = arith.constant dense<0.000000e+00> : vector<8x2xf32>
    %377 = tpu.matmul %3, %347, %cst_35 {dimension_numbers = #tpu.dot_dimension_numbers<[1], [0], [0], [1], [0, 0, 1, 1], [], []>} : vector<8x32xf32>, vector<32x2xf32>, vector<8x2xf32> -> vector<8x2xf32>
    %cst_36 = arith.constant 1.250000e-01 : f32
    %378 = vector.broadcast %cst_36 : f32 to vector<1x2xf32>
    %379 = arith.mulf %356, %378 : vector<1x2xf32>
    %380 = vector.broadcast %4 : vector<8x1xf32> to vector<8x2xf32>
    %381 = vector.broadcast %379 : vector<1x2xf32> to vector<8x2xf32>
    %382 = arith.mulf %380, %381 : vector<8x2xf32>
    %383 = arith.addf %377, %382 : vector<8x2xf32>
    %c2 = arith.constant 2 : index
    %c0_37 = arith.constant 0 : index
    %c0_38 = arith.constant 0 : index
    %384 = vector.load %arg7[%c2, %c0_37, %c0_38] : memref<3x8x2xf32, #tpu.memory_space<vmem>>, vector<1x8x2xf32>
    %385 = vector.shape_cast %384 : vector<1x8x2xf32> to vector<8x2xf32>
    %386 = vector.shape_cast %383 : vector<8x2xf32> to vector<1x8x2xf32>
    tpu.vector_store %arg7[%c2, %c0_37, %c0_38], %386 {strides = array<i32>} : memref<3x8x2xf32, #tpu.memory_space<vmem>>, vector<1x8x2xf32>,
    return
  }
  func.func @transform_0(%arg0: i32) -> (i32, i32, i32) {
    %c0_i32 = arith.constant 0 : i32
    %c0_i32_0 = arith.constant 0 : i32
    %c0_i32_1 = arith.constant 0 : i32
    return %c0_i32, %c0_i32_0, %arg0 : i32, i32, i32
  }
  func.func @transform_1(%arg0: i32) -> (i32, i32) {
    %c0_i32 = arith.constant 0 : i32
    %c0_i32_0 = arith.constant 0 : i32
    return %c0_i32, %arg0 : i32, i32
  }
  func.func @transform_2(%arg0: i32) -> (i32, i32) {
    %c0_i32 = arith.constant 0 : i32
    %c0_i32_0 = arith.constant 0 : i32
    %c0_i32_1 = arith.constant 0 : i32
    return %c0_i32, %c0_i32_0 : i32, i32
  }
  func.func @transform_3(%arg0: i32) -> (i32, i32) {
    %c0_i32 = arith.constant 0 : i32
    %c0_i32_0 = arith.constant 0 : i32
    %c0_i32_1 = arith.constant 0 : i32
    return %c0_i32, %c0_i32_0 : i32, i32
  }
  func.func @transform_4(%arg0: i32) -> (i32, i32) {
    %c0_i32 = arith.constant 0 : i32
    %c0_i32_0 = arith.constant 0 : i32
    %c0_i32_1 = arith.constant 0 : i32
    return %c0_i32, %c0_i32_0 : i32, i32
  }
  func.func @transform_5(%arg0: i32) -> (i32, i32) {
    %c0_i32 = arith.constant 0 : i32
    %c0_i32_0 = arith.constant 0 : i32
    %c0_i32_1 = arith.constant 0 : i32
    return %c0_i32, %c0_i32_0 : i32, i32
  }
  func.func @transform_6(%arg0: i32) -> (i32, i32, i32) {
    %c0_i32 = arith.constant 0 : i32
    %c0_i32_0 = arith.constant 0 : i32
    %c0_i32_1 = arith.constant 0 : i32
    return %c0_i32, %c0_i32_0, %arg0 : i32, i32, i32
  }
}

</mosaic_0001>

<llo_original>
// kernel: tpu_custom_call.1
$region0: #{tpu_custom_call.1}
  #allocation0 [shape = 'u32[]', space=smem, size = 0x4, offset = 0x4, fixed_abs, tag = 'smem constant byte address 0x4 - core index']
  #allocation1 [shape = 'u32[144,128]{1,0:T(1,128)}', space=vmem, size = 0x12000, scoped, tag = 'internal scratch']
  %s0 = inlined_call_operand.vmem [shape: f32[3,8,2], index: 0, kind: input, shape index: {}]
  %s1 = inlined_call_operand.vmem [shape: f32[32,2], index: 1, kind: input, shape index: {}]
  %s2 = inlined_call_operand.vmem [shape: f32[32,8], index: 2, kind: input, shape index: {}]
  %s3 = inlined_call_operand.vmem [shape: f32[32,1], index: 3, kind: input, shape index: {}]
  %s4 = inlined_call_operand.vmem [shape: f32[8,32], index: 4, kind: input, shape index: {}]
  %s5 = inlined_call_operand.vmem [shape: f32[8,1], index: 5, kind: input, shape index: {}]
  %s6 = inlined_call_operand.vmem [shape: f32[3,8,2], index: 6, kind: output, shape index: {}]
  %s7 = sld [smem:[#allocation0]]
  $region34: #{tpu_custom_call.1} parent=0
    _
  %s9 = ssub.s32 1, %s7
  %s10 = scalar_select 0, %s9, %s7
  // Predicated region
  $region2: #{tpu_custom_call.1} parent=0 // pred_check
    _
  $region3: #{tpu_custom_call.1} parent=0 // pred_check_branch
    %12 = sbr.rel (0) target = $region5
  $region4: #{tpu_custom_call.1} parent=0 // pred_region
    _
  $region5: #{tpu_custom_call.1} parent=0 // pred_fallthru
    _
  // Predicated region
  $region6: #{tpu_custom_call.1} parent=0 // pred_check
    _
  $region7: #{tpu_custom_call.1} parent=0 // pred_check_branch
    %14 = sbr.rel (0) target = $region9
  $region8: #{tpu_custom_call.1} parent=0 // pred_region
    _
  $region9: #{tpu_custom_call.1} parent=0 // pred_fallthru
    _
  // Predicated region
  $region10: #{tpu_custom_call.1} parent=0 // pred_check
    _
  $region11: #{tpu_custom_call.1} parent=0 // pred_check_branch
    %16 = sbr.rel (0) target = $region13
  $region12: #{tpu_custom_call.1} parent=0 // pred_region
    _
  $region13: #{tpu_custom_call.1} parent=0 // pred_fallthru
    _
  // Predicated region
  $region14: #{tpu_custom_call.1} parent=0 // pred_check
    _
  $region15: #{tpu_custom_call.1} parent=0 // pred_check_branch
    %18 = sbr.rel (0) target = $region17
  $region16: #{tpu_custom_call.1} parent=0 // pred_region
    _
  $region17: #{tpu_custom_call.1} parent=0 // pred_fallthru
    _
  // Predicated region
  $region18: #{tpu_custom_call.1} parent=0 // pred_check
    _
  $region19: #{tpu_custom_call.1} parent=0 // pred_check_branch
    %20 = sbr.rel (0) target = $region21
  $region20: #{tpu_custom_call.1} parent=0 // pred_region
    _
  $region21: #{tpu_custom_call.1} parent=0 // pred_fallthru
    _
  // Predicated region
  $region22: #{tpu_custom_call.1} parent=0 // pred_check
    _
  $region23: #{tpu_custom_call.1} parent=0 // pred_check_branch
    %22 = sbr.rel (0) target = $region25
  $region24: #{tpu_custom_call.1} parent=0 // pred_region
    _
  $region25: #{tpu_custom_call.1} parent=0 // pred_fallthru
    _
  %v23 = vld [vmem:[%s0] sm:$0xff]
  %v24 = vld [vmem:[%s0 + $0x8] sm:$0xff]
  %v25 = vld [vmem:[%s0 + $0x10] sm:$0xff]
  %v26 = vld [vmem:[%s1] sm:$0xff]
  %v27 = vld [vmem:[%s1 + $0x8] sm:$0xff]
  %v28 = vld [vmem:[%s1 + $0x10] sm:$0xff]
  %v29 = vld [vmem:[%s1 + $0x18] sm:$0xff]
  %v30 = vld [vmem:[%s2] sm:$0xff]
  %v31 = vld [vmem:[%s2 + $0x8] sm:$0xff]
  %v32 = vld [vmem:[%s2 + $0x10] sm:$0xff]
  %v33 = vld [vmem:[%s2 + $0x18] sm:$0xff]
  %v34 = vld [vmem:[%s4] sm:$0xff]
  %v35 = vld [vmem:[%s5] sm:$0xff]
  %v36 = vmul.f32 %v23, %v23
  %v37 = vmul.f32 %v24, %v24
  %v38 = vmul.f32 %v25, %v25
  %v39 = vadd.f32 %v36, %v37
  %v40 = vadd.f32 %v39, %v38
  %v41 = vrsqrt.pop %v40
  %v42 = vmul.f32 %v40, %v41
  %vm43 = vcmp.eq.f32.partialorder %v40, inf
  %v44 = vsel %vm43, %v40, %v42
  %vm45 = vcmp.eq.f32.partialorder %v40, 0.0
  %v46 = vand.u32 %v40, 2147483648
  %v47 = vsel %vm45, %v46, %v44
  %v48 = vadd.f32 %v47, 1e-05
  %vm49 = vcmask 64512
  %v51 = vsel %vm49, %v30, 0
  %v54 = vsel %vm49, %v31, 0
  %v57 = vsel %vm49, %v32, 0
  %v60 = vsel %vm49, %v33, 0
  %62 = vmatprep.subr.mxu0 0.0
  %63 = vmatpush1.msra.mxu0 %v23
  %64 = vmatprep.subr.mxu0 0.0
  %65 = vmatpush1.msra.mxu0 0.0
  %66 = vmatprep.subr.mxu0 0.0
  %67 = vmatpush1.msra.mxu0 0.0
  %68 = vmatprep.subr.mxu0 0.0
  %69 = vmatpush1.msra.mxu0 0.0
  %70 = vmatprep.subr.mxu0 0.0
  %71 = vmatpush1.msra.mxu0 0.0
  %72 = vmatprep.subr.mxu0 0.0
  %73 = vmatpush1.msra.mxu0 0.0
  %74 = vmatprep.subr.mxu0 0.0
  %75 = vmatpush1.msra.mxu0 0.0
  %76 = vmatprep.subr.mxu0 0.0
  %77 = vmatpush1.msra.mxu0 0.0
  %78 = vmatprep.subr.mxu0 0.0
  %79 = vmatpush1.msra.mxu0 0.0
  %80 = vmatprep.subr.mxu0 0.0
  %81 = vmatpush1.msra.mxu0 0.0
  %82 = vmatprep.subr.mxu0 0.0
  %83 = vmatpush1.msra.mxu0 0.0
  %84 = vmatprep.subr.mxu0 0.0
  %85 = vmatpush1.msra.mxu0 0.0
  %86 = vmatprep.subr.mxu0 0.0
  %87 = vmatpush1.msra.mxu0 0.0
  %88 = vmatprep.subr.mxu0 0.0
  %89 = vmatpush1.msra.mxu0 0.0
  %90 = vmatprep.subr.mxu0 0.0
  %91 = vmatpush1.msra.mxu0 0.0
  %92 = vmatprep.subr.mxu0 0.0
  %93 = vmatpush1.msra.mxu0 0.0
  %94 = vmatprep.subr.mxu0 0.0
  %95 = vmatpush1.msra.mxu0 0.0
  %96 = vmatprep.subr.mxu0 0.0
  %97 = vmatpush1.msra.mxu0 0.0
  %98 = vmatprep.subr.mxu0 0.0
  %99 = vmatpush1.msra.mxu0 0.0
  %100 = vmatprep.subr.mxu0 0.0
  %101 = vmatpush1.msra.mxu0 0.0
  %102 = vmatprep.subr.mxu0 0.0
  %103 = vmatpush1.msra.mxu0 0.0
  %104 = vmatprep.subr.mxu0 0.0
  %105 = vmatpush1.msra.mxu0 0.0
  %106 = vmatprep.subr.mxu0 0.0
  %107 = vmatpush1.msra.mxu0 0.0
  %108 = vmatprep.subr.mxu0 0.0
  %109 = vmatpush1.msra.mxu0 0.0
  %110 = vmatprep.subr.mxu0 0.0
  %111 = vmatpush1.msra.mxu0 0.0
  %112 = vmatprep.subr.mxu0 0.0
  %113 = vmatpush1.msra.mxu0 0.0
  %114 = vmatprep.subr.mxu0 0.0
  %115 = vmatpush1.msra.mxu0 0.0
  %116 = vmatprep.subr.mxu0 0.0
  %117 = vmatpush1.msra.mxu0 0.0
  %118 = vmatprep.subr.mxu0 0.0
  %119 = vmatpush1.msra.mxu0 0.0
  %120 = vmatprep.subr.mxu0 0.0
  %121 = vmatpush1.msra.mxu0 0.0
  %122 = vmatprep.subr.mxu0 0.0
  %123 = vmatpush1.msra.mxu0 0.0
  %124 = vmatprep.subr.mxu0 0.0
  %125 = vmatpush1.msra.mxu0 0.0
  %126 = vmatprep.mubr.f32.mxu0 0.0
  %127 = vmatmul.mubr.f32.gmra.mrb[0].mxu0 %v51
  %v128 = vpop.f32.mrb[0].mxu0
  %v129 = vadd.f32 0.0, %v128
  %v130 = vpop.f32.mrb[0].mxu0
  %131 = vmatprep.mubr.f32.mxu0 0.0
  %132 = vmatmul.mubr.f32.gmra.mrb[0].mxu0 %v54
  %v133 = vpop.f32.mrb[0].mxu0
  %v134 = vadd.f32 0.0, %v133
  %v135 = vpop.f32.mrb[0].mxu0
  %136 = vmatprep.mubr.f32.mxu0 0.0
  %137 = vmatmul.mubr.f32.gmra.mrb[0].mxu0 %v57
  %v138 = vpop.f32.mrb[0].mxu0
  %v139 = vadd.f32 0.0, %v138
  %v140 = vpop.f32.mrb[0].mxu0
  %141 = vmatprep.mubr.f32.mxu0 0.0
  %142 = vmatmul.mubr.f32.gmra.mrb[0].mxu0 %v60
  %v143 = vpop.f32.mrb[0].mxu0
  %v144 = vadd.f32 0.0, %v143
  %v145 = vpop.f32.mrb[0].mxu0
  %146 = vdwg.mxu0
  %147 = vmatprep.subr.mxu0 0.0
  %148 = vmatpush1.msra.mxu0 %v24
  %149 = vmatprep.subr.mxu0 0.0
  %150 = vmatpush1.msra.mxu0 0.0
  %151 = vmatprep.subr.mxu0 0.0
  %152 = vmatpush1.msra.mxu0 0.0
  %153 = vmatprep.subr.mxu0 0.0
  %154 = vmatpush1.msra.mxu0 0.0
  %155 = vmatprep.subr.mxu0 0.0
  %156 = vmatpush1.msra.mxu0 0.0
  %157 = vmatprep.subr.mxu0 0.0
  %158 = vmatpush1.msra.mxu0 0.0
  %159 = vmatprep.subr.mxu0 0.0
  %160 = vmatpush1.msra.mxu0 0.0
  %161 = vmatprep.subr.mxu0 0.0
  %162 = vmatpush1.msra.mxu0 0.0
  %163 = vmatprep.subr.mxu0 0.0
  %164 = vmatpush1.msra.mxu0 0.0
  %165 = vmatprep.subr.mxu0 0.0
  %166 = vmatpush1.msra.mxu0 0.0
  %167 = vmatprep.subr.mxu0 0.0
  %168 = vmatpush1.msra.mxu0 0.0
  %169 = vmatprep.subr.mxu0 0.0
  %170 = vmatpush1.msra.mxu0 0.0
  %171 = vmatprep.subr.mxu0 0.0
  %172 = vmatpush1.msra.mxu0 0.0
  %173 = vmatprep.subr.mxu0 0.0
  %174 = vmatpush1.msra.mxu0 0.0
  %175 = vmatprep.subr.mxu0 0.0
  %176 = vmatpush1.msra.mxu0 0.0
  %177 = vmatprep.subr.mxu0 0.0
  %178 = vmatpush1.msra.mxu0 0.0
  %179 = vmatprep.subr.mxu0 0.0
  %180 = vmatpush1.msra.mxu0 0.0
  %181 = vmatprep.subr.mxu0 0.0
  %182 = vmatpush1.msra.mxu0 0.0
  %183 = vmatprep.subr.mxu0 0.0
  %184 = vmatpush1.msra.mxu0 0.0
  %185 = vmatprep.subr.mxu0 0.0
  %186 = vmatpush1.msra.mxu0 0.0
  %187 = vmatprep.subr.mxu0 0.0
  %188 = vmatpush1.msra.mxu0 0.0
  %189 = vmatprep.subr.mxu0 0.0
  %190 = vmatpush1.msra.mxu0 0.0
  %191 = vmatprep.subr.mxu0 0.0
  %192 = vmatpush1.msra.mxu0 0.0
  %193 = vmatprep.subr.mxu0 0.0
  %194 = vmatpush1.msra.mxu0 0.0
  %195 = vmatprep.subr.mxu0 0.0
  %196 = vmatpush1.msra.mxu0 0.0
  %197 = vmatprep.subr.mxu0 0.0
  %198 = vmatpush1.msra.mxu0 0.0
  %199 = vmatprep.subr.mxu0 0.0
  %200 = vmatpush1.msra.mxu0 0.0
  %201 = vmatprep.subr.mxu0 0.0
  %202 = vmatpush1.msra.mxu0 0.0
  %203 = vmatprep.subr.mxu0 0.0
  %204 = vmatpush1.msra.mxu0 0.0
  %205 = vmatprep.subr.mxu0 0.0
  %206 = vmatpush1.msra.mxu0 0.0
  %207 = vmatprep.subr.mxu0 0.0
  %208 = vmatpush1.msra.mxu0 0.0
  %209 = vmatprep.subr.mxu0 0.0
  %210 = vmatpush1.msra.mxu0 0.0
  %211 = vmatprep.mubr.f32.mxu0 0.0
  %212 = vmatmul.mubr.f32.gmra.mrb[0].mxu0 %v51
  %v213 = vpop.f32.mrb[0].mxu0
  %v214 = vadd.f32 0.0, %v213
  %v215 = vpop.f32.mrb[0].mxu0
  %216 = vmatprep.mubr.f32.mxu0 0.0
  %217 = vmatmul.mubr.f32.gmra.mrb[0].mxu0 %v54
  %v218 = vpop.f32.mrb[0].mxu0
  %v219 = vadd.f32 0.0, %v218
  %v220 = vpop.f32.mrb[0].mxu0
  %221 = vmatprep.mubr.f32.mxu0 0.0
  %222 = vmatmul.mubr.f32.gmra.mrb[0].mxu0 %v57
  %v223 = vpop.f32.mrb[0].mxu0
  %v224 = vadd.f32 0.0, %v223
  %v225 = vpop.f32.mrb[0].mxu0
  %226 = vmatprep.mubr.f32.mxu0 0.0
  %227 = vmatmul.mubr.f32.gmra.mrb[0].mxu0 %v60
  %v228 = vpop.f32.mrb[0].mxu0
  %v229 = vadd.f32 0.0, %v228
  %v230 = vpop.f32.mrb[0].mxu0
  %231 = vdwg.mxu0
  %232 = vmatprep.subr.mxu0 0.0
  %233 = vmatpush1.msra.mxu0 %v25
  %234 = vmatprep.subr.mxu0 0.0
  %235 = vmatpush1.msra.mxu0 0.0
  %236 = vmatprep.subr.mxu0 0.0
  %237 = vmatpush1.msra.mxu0 0.0
  %238 = vmatprep.subr.mxu0 0.0
  %239 = vmatpush1.msra.mxu0 0.0
  %240 = vmatprep.subr.mxu0 0.0
  %241 = vmatpush1.msra.mxu0 0.0
  %242 = vmatprep.subr.mxu0 0.0
  %243 = vmatpush1.msra.mxu0 0.0
  %244 = vmatprep.subr.mxu0 0.0
  %245 = vmatpush1.msra.mxu0 0.0
  %246 = vmatprep.subr.mxu0 0.0
  %247 = vmatpush1.msra.mxu0 0.0
  %248 = vmatprep.subr.mxu0 0.0
  %249 = vmatpush1.msra.mxu0 0.0
  %250 = vmatprep.subr.mxu0 0.0
  %251 = vmatpush1.msra.mxu0 0.0
  %252 = vmatprep.subr.mxu0 0.0
  %253 = vmatpush1.msra.mxu0 0.0
  %254 = vmatprep.subr.mxu0 0.0
  %255 = vmatpush1.msra.mxu0 0.0
  %256 = vmatprep.subr.mxu0 0.0
  %257 = vmatpush1.msra.mxu0 0.0
  %258 = vmatprep.subr.mxu0 0.0
  %259 = vmatpush1.msra.mxu0 0.0
  %260 = vmatprep.subr.mxu0 0.0
  %261 = vmatpush1.msra.mxu0 0.0
  %262 = vmatprep.subr.mxu0 0.0
  %263 = vmatpush1.msra.mxu0 0.0
  %264 = vmatprep.subr.mxu0 0.0
  %265 = vmatpush1.msra.mxu0 0.0
  %266 = vmatprep.subr.mxu0 0.0
  %267 = vmatpush1.msra.mxu0 0.0
  %268 = vmatprep.subr.mxu0 0.0
  %269 = vmatpush1.msra.mxu0 0.0
  %270 = vmatprep.subr.mxu0 0.0
  %271 = vmatpush1.msra.mxu0 0.0
  %272 = vmatprep.subr.mxu0 0.0
  %273 = vmatpush1.msra.mxu0 0.0
  %274 = vmatprep.subr.mxu0 0.0
  %275 = vmatpush1.msra.mxu0 0.0
  %276 = vmatprep.subr.mxu0 0.0
  %277 = vmatpush1.msra.mxu0 0.0
  %278 = vmatprep.subr.mxu0 0.0
  %279 = vmatpush1.msra.mxu0 0.0
  %280 = vmatprep.subr.mxu0 0.0
  %281 = vmatpush1.msra.mxu0 0.0
  %282 = vmatprep.subr.mxu0 0.0
  %283 = vmatpush1.msra.mxu0 0.0
  %284 = vmatprep.subr.mxu0 0.0
  %285 = vmatpush1.msra.mxu0 0.0
  %286 = vmatprep.subr.mxu0 0.0
  %287 = vmatpush1.msra.mxu0 0.0
  %288 = vmatprep.subr.mxu0 0.0
  %289 = vmatpush1.msra.mxu0 0.0
  %290 = vmatprep.subr.mxu0 0.0
  %291 = vmatpush1.msra.mxu0 0.0
  %292 = vmatprep.subr.mxu0 0.0
  %293 = vmatpush1.msra.mxu0 0.0
  %294 = vmatprep.subr.mxu0 0.0
  %295 = vmatpush1.msra.mxu0 0.0
  %296 = vmatprep.mubr.f32.mxu0 0.0
  %297 = vmatmul.mubr.f32.gmra.mrb[0].mxu0 %v51
  %v298 = vpop.f32.mrb[0].mxu0
  %v299 = vadd.f32 0.0, %v298
  %v300 = vpop.f32.mrb[0].mxu0
  %301 = vmatprep.mubr.f32.mxu0 0.0
  %302 = vmatmul.mubr.f32.gmra.mrb[0].mxu0 %v54
  %v303 = vpop.f32.mrb[0].mxu0
  %v304 = vadd.f32 0.0, %v303
  %v305 = vpop.f32.mrb[0].mxu0
  %306 = vmatprep.mubr.f32.mxu0 0.0
  %307 = vmatmul.mubr.f32.gmra.mrb[0].mxu0 %v57
  %v308 = vpop.f32.mrb[0].mxu0
  %v309 = vadd.f32 0.0, %v308
  %v310 = vpop.f32.mrb[0].mxu0
  %311 = vmatprep.mubr.f32.mxu0 0.0
  %312 = vmatmul.mubr.f32.gmra.mrb[0].mxu0 %v60
  %v313 = vpop.f32.mrb[0].mxu0
  %v314 = vadd.f32 0.0, %v313
  %v315 = vpop.f32.mrb[0].mxu0
  %316 = vdwg.mxu0
  %v317 = vld [vmem:[%s3] sm:$0xff]
  %v318 = vld [vmem:[%s3 + $0x8] sm:$0xff]
  %v319 = vld [vmem:[%s3 + $0x10] sm:$0xff]
  %v320 = vld [vmem:[%s3 + $0x18] sm:$0xff]
  %322 = vset.pattern.permute.xlu0 0
  %323 = vperm.xlu0 %322, %v317
  %v324 = vpop.permute.xlu0 %323
  %327 = vset.pattern.permute.xlu0 0
  %328 = vperm.xlu0 %327, %v318
  %v329 = vpop.permute.xlu0 %328
  %332 = vset.pattern.permute.xlu0 0
  %333 = vperm.xlu0 %332, %v319
  %v334 = vpop.permute.xlu0 %333
  %337 = vset.pattern.permute.xlu0 0
  %338 = vperm.xlu0 %337, %v320
  %v339 = vpop.permute.xlu0 %338
  %v341 = vlaneseq
  %v342 = vshrl.u32 %v341, 7
  %v343 = vsub.s32 0, %v342
  %v344 = vrot.slane %v23, %v343
  %v345 = vlaneseq
  %v346 = vshrl.u32 %v345, 7
  %v347 = vsub.s32 0, %v346
  %v348 = vrot.slane %v24, %v347
  %v349 = vlaneseq
  %v350 = vshrl.u32 %v349, 7
  %v351 = vsub.s32 0, %v350
  %v352 = vrot.slane %v25, %v351
  %v353 = vlaneseq
  %v354 = vshrl.u32 %v353, 7
  %v355 = vsub.s32 0, %v354
  %v356 = vrot.slane %v48, %v355
  %v357 = vmul.f32 %v344, %v129
  %v358 = vmul.f32 %v344, %v134
  %v359 = vmul.f32 %v344, %v139
  %v360 = vmul.f32 %v344, %v144
  %v361 = vmul.f32 %v348, %v214
  %v362 = vmul.f32 %v348, %v219
  %v363 = vmul.f32 %v348, %v224
  %v364 = vmul.f32 %v348, %v229
  %v365 = vadd.f32 %v357, %v361
  %v366 = vadd.f32 %v358, %v362
  %v367 = vadd.f32 %v359, %v363
  %v368 = vadd.f32 %v360, %v364
  %v369 = vmul.f32 %v352, %v299
  %v370 = vmul.f32 %v352, %v304
  %v371 = vmul.f32 %v352, %v309
  %v372 = vmul.f32 %v352, %v314
  %v373 = vadd.f32 %v365, %v369
  %v374 = vadd.f32 %v366, %v370
  %v375 = vadd.f32 %v367, %v371
  %v376 = vadd.f32 %v368, %v372
  %v377 = vmul.f32 %v356, %v324
  %v378 = vmul.f32 %v356, %v329
  %v379 = vmul.f32 %v356, %v334
  %v380 = vmul.f32 %v356, %v339
  %v381 = vadd.f32 %v373, %v377
  %v382 = vadd.f32 %v374, %v378
  %v383 = vadd.f32 %v375, %v379
  %v384 = vadd.f32 %v376, %v380
  %v385 = vadd.f32 %v381, %v26
  %v386 = vadd.f32 %v382, %v27
  %v387 = vadd.f32 %v383, %v28
  %v388 = vadd.f32 %v384, %v29
  %v389 = vmul.f32 %v385, 0.01
  %v390 = vmul.f32 %v386, 0.01
  %v391 = vmul.f32 %v387, 0.01
  %v392 = vmul.f32 %v388, 0.01
  %v393 = vmax.f32 %v385, %v389
  %v394 = vmax.f32 %v386, %v390
  %v395 = vmax.f32 %v387, %v391
  %v396 = vmax.f32 %v388, %v392
  %v397 = vmul.f32 %v344, %v393
  %v398 = vmul.f32 %v344, %v394
  %v399 = vmul.f32 %v344, %v395
  %v400 = vmul.f32 %v344, %v396
  %v401 = vadd.f32 %v397, 0.0
  %v402 = vadd.f32 %v398, 0.0
  %v403 = vadd.f32 %v399, 0.0
  %v404 = vadd.f32 %v400, 0.0
  %v405 = vmul.f32 %v348, %v393
  %v406 = vmul.f32 %v348, %v394
  %v407 = vmul.f32 %v348, %v395
  %v408 = vmul.f32 %v348, %v396
  %v409 = vadd.f32 %v405, 0.0
  %v410 = vadd.f32 %v406, 0.0
  %v411 = vadd.f32 %v407, 0.0
  %v412 = vadd.f32 %v408, 0.0
  %v413 = vmul.f32 %v352, %v393
  %v414 = vmul.f32 %v352, %v394
  %v415 = vmul.f32 %v352, %v395
  %v416 = vmul.f32 %v352, %v396
  %v417 = vadd.f32 %v413, 0.0
  %v418 = vadd.f32 %v414, 0.0
  %v419 = vadd.f32 %v415, 0.0
  %v420 = vadd.f32 %v416, 0.0
  %v421 = vlaneseq
  %v422 = vshrl.u32 %v421, 7
  %v423 = vsub.s32 1, %v422
  %v424 = vrot.slane %v23, %v423
  %v425 = vlaneseq
  %v426 = vshrl.u32 %v425, 7
  %v427 = vsub.s32 1, %v426
  %v428 = vrot.slane %v24, %v427
  %v429 = vlaneseq
  %v430 = vshrl.u32 %v429, 7
  %v431 = vsub.s32 1, %v430
  %v432 = vrot.slane %v25, %v431
  %v433 = vlaneseq
  %v434 = vshrl.u32 %v433, 7
  %v435 = vsub.s32 1, %v434
  %v436 = vrot.slane %v48, %v435
  %v437 = vmul.f32 %v424, %v129
  %v438 = vmul.f32 %v424, %v134
  %v439 = vmul.f32 %v424, %v139
  %v440 = vmul.f32 %v424, %v144
  %v441 = vmul.f32 %v428, %v214
  %v442 = vmul.f32 %v428, %v219
  %v443 = vmul.f32 %v428, %v224
  %v444 = vmul.f32 %v428, %v229
  %v445 = vadd.f32 %v437, %v441
  %v446 = vadd.f32 %v438, %v442
  %v447 = vadd.f32 %v439, %v443
  %v448 = vadd.f32 %v440, %v444
  %v449 = vmul.f32 %v432, %v299
  %v450 = vmul.f32 %v432, %v304
  %v451 = vmul.f32 %v432, %v309
  %v452 = vmul.f32 %v432, %v314
  %v453 = vadd.f32 %v445, %v449
  %v454 = vadd.f32 %v446, %v450
  %v455 = vadd.f32 %v447, %v451
  %v456 = vadd.f32 %v448, %v452
  %v457 = vmul.f32 %v436, %v324
  %v458 = vmul.f32 %v436, %v329
  %v459 = vmul.f32 %v436, %v334
  %v460 = vmul.f32 %v436, %v339
  %v461 = vadd.f32 %v453, %v457
  %v462 = vadd.f32 %v454, %v458
  %v463 = vadd.f32 %v455, %v459
  %v464 = vadd.f32 %v456, %v460
  %v465 = vadd.f32 %v461, %v26
  %v466 = vadd.f32 %v462, %v27
  %v467 = vadd.f32 %v463, %v28
  %v468 = vadd.f32 %v464, %v29
  %v469 = vmul.f32 %v465, 0.01
  %v470 = vmul.f32 %v466, 0.01
  %v471 = vmul.f32 %v467, 0.01
  %v472 = vmul.f32 %v468, 0.01
  %v473 = vmax.f32 %v465, %v469
  %v474 = vmax.f32 %v466, %v470
  %v475 = vmax.f32 %v467, %v471
  %v476 = vmax.f32 %v468, %v472
  %v477 = vmul.f32 %v424, %v473
  %v478 = vmul.f32 %v424, %v474
  %v479 = vmul.f32 %v424, %v475
  %v480 = vmul.f32 %v424, %v476
  %v481 = vadd.f32 %v401, %v477
  %v482 = vadd.f32 %v402, %v478
  %v483 = vadd.f32 %v403, %v479
  %v484 = vadd.f32 %v404, %v480
  %v485 = vmul.f32 %v428, %v473
  %v486 = vmul.f32 %v428, %v474
  %v487 = vmul.f32 %v428, %v475
  %v488 = vmul.f32 %v428, %v476
  %v489 = vadd.f32 %v409, %v485
  %v490 = vadd.f32 %v410, %v486
  %v491 = vadd.f32 %v411, %v487
  %v492 = vadd.f32 %v412, %v488
  %v493 = vmul.f32 %v432, %v473
  %v494 = vmul.f32 %v432, %v474
  %v495 = vmul.f32 %v432, %v475
  %v496 = vmul.f32 %v432, %v476
  %v497 = vadd.f32 %v417, %v493
  %v498 = vadd.f32 %v418, %v494
  %v499 = vadd.f32 %v419, %v495
  %v500 = vadd.f32 %v420, %v496
  %v502 = vrot.slane %v23, 1
  %v504 = vadd.f32 %v23, %v502
  %v506 = vrot.slane %v24, 1
  %v508 = vadd.f32 %v24, %v506
  %v510 = vrot.slane %v25, 1
  %v512 = vadd.f32 %v25, %v510
  %v513 = vlaneseq
  %v514 = vshrl.u32 %v513, 7
  %v515 = vsub.s32 2, %v514
  %v516 = vrot.slane %v23, %v515
  %v517 = vlaneseq
  %v518 = vshrl.u32 %v517, 7
  %v519 = vsub.s32 2, %v518
  %v520 = vrot.slane %v24, %v519
  %v521 = vlaneseq
  %v522 = vshrl.u32 %v521, 7
  %v523 = vsub.s32 2, %v522
  %v524 = vrot.slane %v25, %v523
  %v525 = vlaneseq
  %v526 = vshrl.u32 %v525, 7
  %v527 = vsub.s32 2, %v526
  %v528 = vrot.slane %v48, %v527
  %v529 = vmul.f32 %v516, %v129
  %v530 = vmul.f32 %v516, %v134
  %v531 = vmul.f32 %v516, %v139
  %v532 = vmul.f32 %v516, %v144
  %v533 = vmul.f32 %v520, %v214
  %v534 = vmul.f32 %v520, %v219
  %v535 = vmul.f32 %v520, %v224
  %v536 = vmul.f32 %v520, %v229
  %v537 = vadd.f32 %v529, %v533
  %v538 = vadd.f32 %v530, %v534
  %v539 = vadd.f32 %v531, %v535
  %v540 = vadd.f32 %v532, %v536
  %v541 = vmul.f32 %v524, %v299
  %v542 = vmul.f32 %v524, %v304
  %v543 = vmul.f32 %v524, %v309
  %v544 = vmul.f32 %v524, %v314
  %v545 = vadd.f32 %v537, %v541
  %v546 = vadd.f32 %v538, %v542
  %v547 = vadd.f32 %v539, %v543
  %v548 = vadd.f32 %v540, %v544
  %v549 = vmul.f32 %v528, %v324
  %v550 = vmul.f32 %v528, %v329
  %v551 = vmul.f32 %v528, %v334
  %v552 = vmul.f32 %v528, %v339
  %v553 = vadd.f32 %v545, %v549
  %v554 = vadd.f32 %v546, %v550
  %v555 = vadd.f32 %v547, %v551
  %v556 = vadd.f32 %v548, %v552
  %v557 = vadd.f32 %v553, %v26
  %v558 = vadd.f32 %v554, %v27
  %v559 = vadd.f32 %v555, %v28
  %v560 = vadd.f32 %v556, %v29
  %v561 = vmul.f32 %v557, 0.01
  %v562 = vmul.f32 %v558, 0.01
  %v563 = vmul.f32 %v559, 0.01
  %v564 = vmul.f32 %v560, 0.01
  %v565 = vmax.f32 %v557, %v561
  %v566 = vmax.f32 %v558, %v562
  %v567 = vmax.f32 %v559, %v563
  %v568 = vmax.f32 %v560, %v564
  %v569 = vmul.f32 %v516, %v565
  %v570 = vmul.f32 %v516, %v566
  %v571 = vmul.f32 %v516, %v567
  %v572 = vmul.f32 %v516, %v568
  %v573 = vadd.f32 %v481, %v569
  %v574 = vadd.f32 %v482, %v570
  %v575 = vadd.f32 %v483, %v571
  %v576 = vadd.f32 %v484, %v572
  %v577 = vmul.f32 %v520, %v565
  %v578 = vmul.f32 %v520, %v566
  %v579 = vmul.f32 %v520, %v567
  %v580 = vmul.f32 %v520, %v568
  %v581 = vadd.f32 %v489, %v577
  %v582 = vadd.f32 %v490, %v578
  %v583 = vadd.f32 %v491, %v579
  %v584 = vadd.f32 %v492, %v580
  %v585 = vmul.f32 %v524, %v565
  %v586 = vmul.f32 %v524, %v566
  %v587 = vmul.f32 %v524, %v567
  %v588 = vmul.f32 %v524, %v568
  %v589 = vadd.f32 %v497, %v585
  %v590 = vadd.f32 %v498, %v586
  %v591 = vadd.f32 %v499, %v587
  %v592 = vadd.f32 %v500, %v588
  %v593 = vrot.slane %v23, 2
  %v595 = vadd.f32 %v504, %v593
  %v596 = vrot.slane %v24, 2
  %v598 = vadd.f32 %v508, %v596
  %v599 = vrot.slane %v25, 2
  %v601 = vadd.f32 %v512, %v599
  %v602 = vlaneseq
  %v603 = vshrl.u32 %v602, 7
  %v604 = vsub.s32 3, %v603
  %v605 = vrot.slane %v23, %v604
  %v606 = vlaneseq
  %v607 = vshrl.u32 %v606, 7
  %v608 = vsub.s32 3, %v607
  %v609 = vrot.slane %v24, %v608
  %v610 = vlaneseq
  %v611 = vshrl.u32 %v610, 7
  %v612 = vsub.s32 3, %v611
  %v613 = vrot.slane %v25, %v612
  %v614 = vlaneseq
  %v615 = vshrl.u32 %v614, 7
  %v616 = vsub.s32 3, %v615
  %v617 = vrot.slane %v48, %v616
  %v618 = vmul.f32 %v605, %v129
  %v619 = vmul.f32 %v605, %v134
  %v620 = vmul.f32 %v605, %v139
  %v621 = vmul.f32 %v605, %v144
  %v622 = vmul.f32 %v609, %v214
  %v623 = vmul.f32 %v609, %v219
  %v624 = vmul.f32 %v609, %v224
  %v625 = vmul.f32 %v609, %v229
  %v626 = vadd.f32 %v618, %v622
  %v627 = vadd.f32 %v619, %v623
  %v628 = vadd.f32 %v620, %v624
  %v629 = vadd.f32 %v621, %v625
  %v630 = vmul.f32 %v613, %v299
  %v631 = vmul.f32 %v613, %v304
  %v632 = vmul.f32 %v613, %v309
  %v633 = vmul.f32 %v613, %v314
  %v634 = vadd.f32 %v626, %v630
  %v635 = vadd.f32 %v627, %v631
  %v636 = vadd.f32 %v628, %v632
  %v637 = vadd.f32 %v629, %v633
  %v638 = vmul.f32 %v617, %v324
  %v639 = vmul.f32 %v617, %v329
  %v640 = vmul.f32 %v617, %v334
  %v641 = vmul.f32 %v617, %v339
  %v642 = vadd.f32 %v634, %v638
  %v643 = vadd.f32 %v635, %v639
  %v644 = vadd.f32 %v636, %v640
  %v645 = vadd.f32 %v637, %v641
  %v646 = vadd.f32 %v642, %v26
  %v647 = vadd.f32 %v643, %v27
  %v648 = vadd.f32 %v644, %v28
  %v649 = vadd.f32 %v645, %v29
  %v650 = vmul.f32 %v646, 0.01
  %v651 = vmul.f32 %v647, 0.01
  %v652 = vmul.f32 %v648, 0.01
  %v653 = vmul.f32 %v649, 0.01
  %v654 = vmax.f32 %v646, %v650
  %v655 = vmax.f32 %v647, %v651
  %v656 = vmax.f32 %v648, %v652
  %v657 = vmax.f32 %v649, %v653
  %v658 = vmul.f32 %v605, %v654
  %v659 = vmul.f32 %v605, %v655
  %v660 = vmul.f32 %v605, %v656
  %v661 = vmul.f32 %v605, %v657
  %v662 = vadd.f32 %v573, %v658
  %v663 = vadd.f32 %v574, %v659
  %v664 = vadd.f32 %v575, %v660
  %v665 = vadd.f32 %v576, %v661
  %v666 = vmul.f32 %v609, %v654
  %v667 = vmul.f32 %v609, %v655
  %v668 = vmul.f32 %v609, %v656
  %v669 = vmul.f32 %v609, %v657
  %v670 = vadd.f32 %v581, %v666
  %v671 = vadd.f32 %v582, %v667
  %v672 = vadd.f32 %v583, %v668
  %v673 = vadd.f32 %v584, %v669
  %v674 = vmul.f32 %v613, %v654
  %v675 = vmul.f32 %v613, %v655
  %v676 = vmul.f32 %v613, %v656
  %v677 = vmul.f32 %v613, %v657
  %v678 = vadd.f32 %v589, %v674
  %v679 = vadd.f32 %v590, %v675
  %v680 = vadd.f32 %v591, %v676
  %v681 = vadd.f32 %v592, %v677
  %v682 = vrot.slane %v23, 3
  %v684 = vadd.f32 %v595, %v682
  %v685 = vrot.slane %v24, 3
  %v687 = vadd.f32 %v598, %v685
  %v688 = vrot.slane %v25, 3
  %v690 = vadd.f32 %v601, %v688
  %v691 = vlaneseq
  %v692 = vshrl.u32 %v691, 7
  %v693 = vsub.s32 4, %v692
  %v694 = vrot.slane %v23, %v693
  %v695 = vlaneseq
  %v696 = vshrl.u32 %v695, 7
  %v697 = vsub.s32 4, %v696
  %v698 = vrot.slane %v24, %v697
  %v699 = vlaneseq
  %v700 = vshrl.u32 %v699, 7
  %v701 = vsub.s32 4, %v700
  %v702 = vrot.slane %v25, %v701
  %v703 = vlaneseq
  %v704 = vshrl.u32 %v703, 7
  %v705 = vsub.s32 4, %v704
  %v706 = vrot.slane %v48, %v705
  %v707 = vmul.f32 %v694, %v129
  %v708 = vmul.f32 %v694, %v134
  %v709 = vmul.f32 %v694, %v139
  %v710 = vmul.f32 %v694, %v144
  %v711 = vmul.f32 %v698, %v214
  %v712 = vmul.f32 %v698, %v219
  %v713 = vmul.f32 %v698, %v224
  %v714 = vmul.f32 %v698, %v229
  %v715 = vadd.f32 %v707, %v711
  %v716 = vadd.f32 %v708, %v712
  %v717 = vadd.f32 %v709, %v713
  %v718 = vadd.f32 %v710, %v714
  %v719 = vmul.f32 %v702, %v299
  %v720 = vmul.f32 %v702, %v304
  %v721 = vmul.f32 %v702, %v309
  %v722 = vmul.f32 %v702, %v314
  %v723 = vadd.f32 %v715, %v719
  %v724 = vadd.f32 %v716, %v720
  %v725 = vadd.f32 %v717, %v721
  %v726 = vadd.f32 %v718, %v722
  %v727 = vmul.f32 %v706, %v324
  %v728 = vmul.f32 %v706, %v329
  %v729 = vmul.f32 %v706, %v334
  %v730 = vmul.f32 %v706, %v339
  %v731 = vadd.f32 %v723, %v727
  %v732 = vadd.f32 %v724, %v728
  %v733 = vadd.f32 %v725, %v729
  %v734 = vadd.f32 %v726, %v730
  %v735 = vadd.f32 %v731, %v26
  %v736 = vadd.f32 %v732, %v27
  %v737 = vadd.f32 %v733, %v28
  %v738 = vadd.f32 %v734, %v29
  %v739 = vmul.f32 %v735, 0.01
  %v740 = vmul.f32 %v736, 0.01
  %v741 = vmul.f32 %v737, 0.01
  %v742 = vmul.f32 %v738, 0.01
  %v743 = vmax.f32 %v735, %v739
  %v744 = vmax.f32 %v736, %v740
  %v745 = vmax.f32 %v737, %v741
  %v746 = vmax.f32 %v738, %v742
  %v747 = vmul.f32 %v694, %v743
  %v748 = vmul.f32 %v694, %v744
  %v749 = vmul.f32 %v694, %v745
  %v750 = vmul.f32 %v694, %v746
  %v751 = vadd.f32 %v662, %v747
  %v752 = vadd.f32 %v663, %v748
  %v753 = vadd.f32 %v664, %v749
  %v754 = vadd.f32 %v665, %v750
  %v755 = vmul.f32 %v698, %v743
  %v756 = vmul.f32 %v698, %v744
  %v757 = vmul.f32 %v698, %v745
  %v758 = vmul.f32 %v698, %v746
  %v759 = vadd.f32 %v670, %v755
  %v760 = vadd.f32 %v671, %v756
  %v761 = vadd.f32 %v672, %v757
  %v762 = vadd.f32 %v673, %v758
  %v763 = vmul.f32 %v702, %v743
  %v764 = vmul.f32 %v702, %v744
  %v765 = vmul.f32 %v702, %v745
  %v766 = vmul.f32 %v702, %v746
  %v767 = vadd.f32 %v678, %v763
  %v768 = vadd.f32 %v679, %v764
  %v769 = vadd.f32 %v680, %v765
  %v770 = vadd.f32 %v681, %v766
  %v771 = vrot.slane %v23, 4
  %v773 = vadd.f32 %v684, %v771
  %v774 = vrot.slane %v24, 4
  %v776 = vadd.f32 %v687, %v774
  %v777 = vrot.slane %v25, 4
  %v779 = vadd.f32 %v690, %v777
  %v780 = vlaneseq
  %v781 = vshrl.u32 %v780, 7
  %v782 = vsub.s32 5, %v781
  %v783 = vrot.slane %v23, %v782
  %v784 = vlaneseq
  %v785 = vshrl.u32 %v784, 7
  %v786 = vsub.s32 5, %v785
  %v787 = vrot.slane %v24, %v786
  %v788 = vlaneseq
  %v789 = vshrl.u32 %v788, 7
  %v790 = vsub.s32 5, %v789
  %v791 = vrot.slane %v25, %v790
  %v792 = vlaneseq
  %v793 = vshrl.u32 %v792, 7
  %v794 = vsub.s32 5, %v793
  %v795 = vrot.slane %v48, %v794
  %v796 = vmul.f32 %v783, %v129
  %v797 = vmul.f32 %v783, %v134
  %v798 = vmul.f32 %v783, %v139
  %v799 = vmul.f32 %v783, %v144
  %v800 = vmul.f32 %v787, %v214
  %v801 = vmul.f32 %v787, %v219
  %v802 = vmul.f32 %v787, %v224
  %v803 = vmul.f32 %v787, %v229
  %v804 = vadd.f32 %v796, %v800
  %v805 = vadd.f32 %v797, %v801
  %v806 = vadd.f32 %v798, %v802
  %v807 = vadd.f32 %v799, %v803
  %v808 = vmul.f32 %v791, %v299
  %v809 = vmul.f32 %v791, %v304
  %v810 = vmul.f32 %v791, %v309
  %v811 = vmul.f32 %v791, %v314
  %v812 = vadd.f32 %v804, %v808
  %v813 = vadd.f32 %v805, %v809
  %v814 = vadd.f32 %v806, %v810
  %v815 = vadd.f32 %v807, %v811
  %v816 = vmul.f32 %v795, %v324
  %v817 = vmul.f32 %v795, %v329
  %v818 = vmul.f32 %v795, %v334
  %v819 = vmul.f32 %v795, %v339
  %v820 = vadd.f32 %v812, %v816
  %v821 = vadd.f32 %v813, %v817
  %v822 = vadd.f32 %v814, %v818
  %v823 = vadd.f32 %v815, %v819
  %v824 = vadd.f32 %v820, %v26
  %v825 = vadd.f32 %v821, %v27
  %v826 = vadd.f32 %v822, %v28
  %v827 = vadd.f32 %v823, %v29
  %v828 = vmul.f32 %v824, 0.01
  %v829 = vmul.f32 %v825, 0.01
  %v830 = vmul.f32 %v826, 0.01
  %v831 = vmul.f32 %v827, 0.01
  %v832 = vmax.f32 %v824, %v828
  %v833 = vmax.f32 %v825, %v829
  %v834 = vmax.f32 %v826, %v830
  %v835 = vmax.f32 %v827, %v831
  %v836 = vmul.f32 %v783, %v832
  %v837 = vmul.f32 %v783, %v833
  %v838 = vmul.f32 %v783, %v834
  %v839 = vmul.f32 %v783, %v835
  %v840 = vadd.f32 %v751, %v836
  %v841 = vadd.f32 %v752, %v837
  %v842 = vadd.f32 %v753, %v838
  %v843 = vadd.f32 %v754, %v839
  %v844 = vmul.f32 %v787, %v832
  %v845 = vmul.f32 %v787, %v833
  %v846 = vmul.f32 %v787, %v834
  %v847 = vmul.f32 %v787, %v835
  %v848 = vadd.f32 %v759, %v844
  %v849 = vadd.f32 %v760, %v845
  %v850 = vadd.f32 %v761, %v846
  %v851 = vadd.f32 %v762, %v847
  %v852 = vmul.f32 %v791, %v832
  %v853 = vmul.f32 %v791, %v833
  %v854 = vmul.f32 %v791, %v834
  %v855 = vmul.f32 %v791, %v835
  %v856 = vadd.f32 %v767, %v852
  %v857 = vadd.f32 %v768, %v853
  %v858 = vadd.f32 %v769, %v854
  %v859 = vadd.f32 %v770, %v855
  %v860 = vrot.slane %v23, 5
  %v862 = vadd.f32 %v773, %v860
  %v863 = vrot.slane %v24, 5
  %v865 = vadd.f32 %v776, %v863
  %v866 = vrot.slane %v25, 5
  %v868 = vadd.f32 %v779, %v866
  %v869 = vlaneseq
  %v870 = vshrl.u32 %v869, 7
  %v871 = vsub.s32 6, %v870
  %v872 = vrot.slane %v23, %v871
  %v873 = vlaneseq
  %v874 = vshrl.u32 %v873, 7
  %v875 = vsub.s32 6, %v874
  %v876 = vrot.slane %v24, %v875
  %v877 = vlaneseq
  %v878 = vshrl.u32 %v877, 7
  %v879 = vsub.s32 6, %v878
  %v880 = vrot.slane %v25, %v879
  %v881 = vlaneseq
  %v882 = vshrl.u32 %v881, 7
  %v883 = vsub.s32 6, %v882
  %v884 = vrot.slane %v48, %v883
  %v885 = vmul.f32 %v872, %v129
  %v886 = vmul.f32 %v872, %v134
  %v887 = vmul.f32 %v872, %v139
  %v888 = vmul.f32 %v872, %v144
  %v889 = vmul.f32 %v876, %v214
  %v890 = vmul.f32 %v876, %v219
  %v891 = vmul.f32 %v876, %v224
  %v892 = vmul.f32 %v876, %v229
  %v893 = vadd.f32 %v885, %v889
  %v894 = vadd.f32 %v886, %v890
  %v895 = vadd.f32 %v887, %v891
  %v896 = vadd.f32 %v888, %v892
  %v897 = vmul.f32 %v880, %v299
  %v898 = vmul.f32 %v880, %v304
  %v899 = vmul.f32 %v880, %v309
  %v900 = vmul.f32 %v880, %v314
  %v901 = vadd.f32 %v893, %v897
  %v902 = vadd.f32 %v894, %v898
  %v903 = vadd.f32 %v895, %v899
  %v904 = vadd.f32 %v896, %v900
  %v905 = vmul.f32 %v884, %v324
  %v906 = vmul.f32 %v884, %v329
  %v907 = vmul.f32 %v884, %v334
  %v908 = vmul.f32 %v884, %v339
  %v909 = vadd.f32 %v901, %v905
  %v910 = vadd.f32 %v902, %v906
  %v911 = vadd.f32 %v903, %v907
  %v912 = vadd.f32 %v904, %v908
  %v913 = vadd.f32 %v909, %v26
  %v914 = vadd.f32 %v910, %v27
  %v915 = vadd.f32 %v911, %v28
  %v916 = vadd.f32 %v912, %v29
  %v917 = vmul.f32 %v913, 0.01
  %v918 = vmul.f32 %v914, 0.01
  %v919 = vmul.f32 %v915, 0.01
  %v920 = vmul.f32 %v916, 0.01
  %v921 = vmax.f32 %v913, %v917
  %v922 = vmax.f32 %v914, %v918
  %v923 = vmax.f32 %v915, %v919
  %v924 = vmax.f32 %v916, %v920
  %v925 = vmul.f32 %v872, %v921
  %v926 = vmul.f32 %v872, %v922
  %v927 = vmul.f32 %v872, %v923
  %v928 = vmul.f32 %v872, %v924
  %v929 = vadd.f32 %v840, %v925
  %v930 = vadd.f32 %v841, %v926
  %v931 = vadd.f32 %v842, %v927
  %v932 = vadd.f32 %v843, %v928
  %v933 = vmul.f32 %v876, %v921
  %v934 = vmul.f32 %v876, %v922
  %v935 = vmul.f32 %v876, %v923
  %v936 = vmul.f32 %v876, %v924
  %v937 = vadd.f32 %v848, %v933
  %v938 = vadd.f32 %v849, %v934
  %v939 = vadd.f32 %v850, %v935
  %v940 = vadd.f32 %v851, %v936
  %v941 = vmul.f32 %v880, %v921
  %v942 = vmul.f32 %v880, %v922
  %v943 = vmul.f32 %v880, %v923
  %v944 = vmul.f32 %v880, %v924
  %v945 = vadd.f32 %v856, %v941
  %v946 = vadd.f32 %v857, %v942
  %v947 = vadd.f32 %v858, %v943
  %v948 = vadd.f32 %v859, %v944
  %v949 = vrot.slane %v23, 6
  %v951 = vadd.f32 %v862, %v949
  %v952 = vrot.slane %v24, 6
  %v954 = vadd.f32 %v865, %v952
  %v955 = vrot.slane %v25, 6
  %v957 = vadd.f32 %v868, %v955
  %v958 = vlaneseq
  %v959 = vshrl.u32 %v958, 7
  %v960 = vsub.s32 7, %v959
  %v961 = vrot.slane %v23, %v960
  %v962 = vlaneseq
  %v963 = vshrl.u32 %v962, 7
  %v964 = vsub.s32 7, %v963
  %v965 = vrot.slane %v24, %v964
  %v966 = vlaneseq
  %v967 = vshrl.u32 %v966, 7
  %v968 = vsub.s32 7, %v967
  %v969 = vrot.slane %v25, %v968
  %v970 = vlaneseq
  %v971 = vshrl.u32 %v970, 7
  %v972 = vsub.s32 7, %v971
  %v973 = vrot.slane %v48, %v972
  %v974 = vmul.f32 %v961, %v129
  %v975 = vmul.f32 %v961, %v134
  %v976 = vmul.f32 %v961, %v139
  %v977 = vmul.f32 %v961, %v144
  %v978 = vmul.f32 %v965, %v214
  %v979 = vmul.f32 %v965, %v219
  %v980 = vmul.f32 %v965, %v224
  %v981 = vmul.f32 %v965, %v229
  %v982 = vadd.f32 %v974, %v978
  %v983 = vadd.f32 %v975, %v979
  %v984 = vadd.f32 %v976, %v980
  %v985 = vadd.f32 %v977, %v981
  %v986 = vmul.f32 %v969, %v299
  %v987 = vmul.f32 %v969, %v304
  %v988 = vmul.f32 %v969, %v309
  %v989 = vmul.f32 %v969, %v314
  %v990 = vadd.f32 %v982, %v986
  %v991 = vadd.f32 %v983, %v987
  %v992 = vadd.f32 %v984, %v988
  %v993 = vadd.f32 %v985, %v989
  %v994 = vmul.f32 %v973, %v324
  %v995 = vmul.f32 %v973, %v329
  %v996 = vmul.f32 %v973, %v334
  %v997 = vmul.f32 %v973, %v339
  %v998 = vadd.f32 %v990, %v994
  %v999 = vadd.f32 %v991, %v995
  %v1000 = vadd.f32 %v992, %v996
  %v1001 = vadd.f32 %v993, %v997
  %v1002 = vadd.f32 %v998, %v26
  %v1003 = vadd.f32 %v999, %v27
  %v1004 = vadd.f32 %v1000, %v28
  %v1005 = vadd.f32 %v1001, %v29
  %v1006 = vmul.f32 %v1002, 0.01
  %v1007 = vmul.f32 %v1003, 0.01
  %v1008 = vmul.f32 %v1004, 0.01
  %v1009 = vmul.f32 %v1005, 0.01
  %v1010 = vmax.f32 %v1002, %v1006
  %v1011 = vmax.f32 %v1003, %v1007
  %v1012 = vmax.f32 %v1004, %v1008
  %v1013 = vmax.f32 %v1005, %v1009
  %v1014 = vmul.f32 %v961, %v1010
  %v1015 = vmul.f32 %v961, %v1011
  %v1016 = vmul.f32 %v961, %v1012
  %v1017 = vmul.f32 %v961, %v1013
  %v1018 = vadd.f32 %v929, %v1014
  %v1019 = vadd.f32 %v930, %v1015
  %v1020 = vadd.f32 %v931, %v1016
  %v1021 = vadd.f32 %v932, %v1017
  %v1022 = vmul.f32 %v965, %v1010
  %v1023 = vmul.f32 %v965, %v1011
  %v1024 = vmul.f32 %v965, %v1012
  %v1025 = vmul.f32 %v965, %v1013
  %v1026 = vadd.f32 %v937, %v1022
  %v1027 = vadd.f32 %v938, %v1023
  %v1028 = vadd.f32 %v939, %v1024
  %v1029 = vadd.f32 %v940, %v1025
  %v1030 = vmul.f32 %v969, %v1010
  %v1031 = vmul.f32 %v969, %v1011
  %v1032 = vmul.f32 %v969, %v1012
  %v1033 = vmul.f32 %v969, %v1013
  %v1034 = vadd.f32 %v945, %v1030
  %v1035 = vadd.f32 %v946, %v1031
  %v1036 = vadd.f32 %v947, %v1032
  %v1037 = vadd.f32 %v948, %v1033
  %v1038 = vrot.slane %v23, 7
  %v1040 = vadd.f32 %v951, %v1038
  %v1041 = vrot.slane %v24, 7
  %v1043 = vadd.f32 %v954, %v1041
  %v1044 = vrot.slane %v25, 7
  %v1046 = vadd.f32 %v957, %v1044
  %v1047 = vmul.f32 %v1040, 0.125
  %1049 = vset.pattern.permute.xlu0 0
  %1050 = vperm.xlu0 %1049, %v35
  %v1051 = vpop.permute.xlu0 %1050
  %v1053 = vlaneseq
  %v1054 = vshrl.u32 %v1053, 7
  %v1055 = vsub.s32 0, %v1054
  %v1056 = vrot.slane %v1047, %v1055
  %v1057 = vmul.f32 %v1051, %v1056
  %vm1058 = vcmask 261120
  %v1060 = vsel %vm1058, %v34, 0
  %1062 = vmatprep.subr.mxu0 0.0
  %1063 = vmatpush1.msra.mxu0 %v1018
  %1064 = vmatprep.subr.mxu0 0.0
  %1065 = vmatpush1.msra.mxu0 %v1019
  %1066 = vmatprep.subr.mxu0 0.0
  %1067 = vmatpush1.msra.mxu0 %v1020
  %1068 = vmatprep.subr.mxu0 0.0
  %1069 = vmatpush1.msra.mxu0 %v1021
  %1070 = vmatprep.subr.mxu0 0.0
  %1071 = vmatpush1.msra.mxu0 0.0
  %1072 = vmatprep.subr.mxu0 0.0
  %1073 = vmatpush1.msra.mxu0 0.0
  %1074 = vmatprep.subr.mxu0 0.0
  %1075 = vmatpush1.msra.mxu0 0.0
  %1076 = vmatprep.subr.mxu0 0.0
  %1077 = vmatpush1.msra.mxu0 0.0
  %1078 = vmatprep.subr.mxu0 0.0
  %1079 = vmatpush1.msra.mxu0 0.0
  %1080 = vmatprep.subr.mxu0 0.0
  %1081 = vmatpush1.msra.mxu0 0.0
  %1082 = vmatprep.subr.mxu0 0.0
  %1083 = vmatpush1.msra.mxu0 0.0
  %1084 = vmatprep.subr.mxu0 0.0
  %1085 = vmatpush1.msra.mxu0 0.0
  %1086 = vmatprep.subr.mxu0 0.0
  %1087 = vmatpush1.msra.mxu0 0.0
  %1088 = vmatprep.subr.mxu0 0.0
  %1089 = vmatpush1.msra.mxu0 0.0
  %1090 = vmatprep.subr.mxu0 0.0
  %1091 = vmatpush1.msra.mxu0 0.0
  %1092 = vmatprep.subr.mxu0 0.0
  %1093 = vmatpush1.msra.mxu0 0.0
  %1094 = vmatprep.subr.mxu0 0.0
  %1095 = vmatpush1.msra.mxu0 0.0
  %1096 = vmatprep.subr.mxu0 0.0
  %1097 = vmatpush1.msra.mxu0 0.0
  %1098 = vmatprep.subr.mxu0 0.0
  %1099 = vmatpush1.msra.mxu0 0.0
  %1100 = vmatprep.subr.mxu0 0.0
  %1101 = vmatpush1.msra.mxu0 0.0
  %1102 = vmatprep.subr.mxu0 0.0
  %1103 = vmatpush1.msra.mxu0 0.0
  %1104 = vmatprep.subr.mxu0 0.0
  %1105 = vmatpush1.msra.mxu0 0.0
  %1106 = vmatprep.subr.mxu0 0.0
  %1107 = vmatpush1.msra.mxu0 0.0
  %1108 = vmatprep.subr.mxu0 0.0
  %1109 = vmatpush1.msra.mxu0 0.0
  %1110 = vmatprep.subr.mxu0 0.0
  %1111 = vmatpush1.msra.mxu0 0.0
  %1112 = vmatprep.subr.mxu0 0.0
  %1113 = vmatpush1.msra.mxu0 0.0
  %1114 = vmatprep.subr.mxu0 0.0
  %1115 = vmatpush1.msra.mxu0 0.0
  %1116 = vmatprep.subr.mxu0 0.0
  %1117 = vmatpush1.msra.mxu0 0.0
  %1118 = vmatprep.subr.mxu0 0.0
  %1119 = vmatpush1.msra.mxu0 0.0
  %1120 = vmatprep.subr.mxu0 0.0
  %1121 = vmatpush1.msra.mxu0 0.0
  %1122 = vmatprep.subr.mxu0 0.0
  %1123 = vmatpush1.msra.mxu0 0.0
  %1124 = vmatprep.subr.mxu0 0.0
  %1125 = vmatpush1.msra.mxu0 0.0
  %1126 = vmatprep.mubr.f32.mxu0 0.0
  %1127 = vmatmul.mubr.f32.gmra.mrb[0].mxu0 %v1060
  %v1128 = vpop.f32.mrb[0].mxu0
  %v1129 = vadd.f32 %v1057, %v1128
  %v1130 = vpop.f32.mrb[0].mxu0
  %1131 = vdwg.mxu0
  %vm1132 = vcmask 15360
  %1133 = vst.msk [vmem:[%s6] sm:$0xff] %vm1132, %v1129
  %v1134 = vmul.f32 %v1043, 0.125
  %v1135 = vlaneseq
  %v1136 = vshrl.u32 %v1135, 7
  %v1137 = vsub.s32 0, %v1136
  %v1138 = vrot.slane %v1134, %v1137
  %v1139 = vmul.f32 %v1051, %v1138
  %1140 = vmatprep.subr.mxu0 0.0
  %1141 = vmatpush1.msra.mxu0 %v1026
  %1142 = vmatprep.subr.mxu0 0.0
  %1143 = vmatpush1.msra.mxu0 %v1027
  %1144 = vmatprep.subr.mxu0 0.0
  %1145 = vmatpush1.msra.mxu0 %v1028
  %1146 = vmatprep.subr.mxu0 0.0
  %1147 = vmatpush1.msra.mxu0 %v1029
  %1148 = vmatprep.subr.mxu0 0.0
  %1149 = vmatpush1.msra.mxu0 0.0
  %1150 = vmatprep.subr.mxu0 0.0
  %1151 = vmatpush1.msra.mxu0 0.0
  %1152 = vmatprep.subr.mxu0 0.0
  %1153 = vmatpush1.msra.mxu0 0.0
  %1154 = vmatprep.subr.mxu0 0.0
  %1155 = vmatpush1.msra.mxu0 0.0
  %1156 = vmatprep.subr.mxu0 0.0
  %1157 = vmatpush1.msra.mxu0 0.0
  %1158 = vmatprep.subr.mxu0 0.0
  %1159 = vmatpush1.msra.mxu0 0.0
  %1160 = vmatprep.subr.mxu0 0.0
  %1161 = vmatpush1.msra.mxu0 0.0
  %1162 = vmatprep.subr.mxu0 0.0
  %1163 = vmatpush1.msra.mxu0 0.0
  %1164 = vmatprep.subr.mxu0 0.0
  %1165 = vmatpush1.msra.mxu0 0.0
  %1166 = vmatprep.subr.mxu0 0.0
  %1167 = vmatpush1.msra.mxu0 0.0
  %1168 = vmatprep.subr.mxu0 0.0
  %1169 = vmatpush1.msra.mxu0 0.0
  %1170 = vmatprep.subr.mxu0 0.0
  %1171 = vmatpush1.msra.mxu0 0.0
  %1172 = vmatprep.subr.mxu0 0.0
  %1173 = vmatpush1.msra.mxu0 0.0
  %1174 = vmatprep.subr.mxu0 0.0
  %1175 = vmatpush1.msra.mxu0 0.0
  %1176 = vmatprep.subr.mxu0 0.0
  %1177 = vmatpush1.msra.mxu0 0.0
  %1178 = vmatprep.subr.mxu0 0.0
  %1179 = vmatpush1.msra.mxu0 0.0
  %1180 = vmatprep.subr.mxu0 0.0
  %1181 = vmatpush1.msra.mxu0 0.0
  %1182 = vmatprep.subr.mxu0 0.0
  %1183 = vmatpush1.msra.mxu0 0.0
  %1184 = vmatprep.subr.mxu0 0.0
  %1185 = vmatpush1.msra.mxu0 0.0
  %1186 = vmatprep.subr.mxu0 0.0
  %1187 = vmatpush1.msra.mxu0 0.0
  %1188 = vmatprep.subr.mxu0 0.0
  %1189 = vmatpush1.msra.mxu0 0.0
  %1190 = vmatprep.subr.mxu0 0.0
  %1191 = vmatpush1.msra.mxu0 0.0
  %1192 = vmatprep.subr.mxu0 0.0
  %1193 = vmatpush1.msra.mxu0 0.0
  %1194 = vmatprep.subr.mxu0 0.0
  %1195 = vmatpush1.msra.mxu0 0.0
  %1196 = vmatprep.subr.mxu0 0.0
  %1197 = vmatpush1.msra.mxu0 0.0
  %1198 = vmatprep.subr.mxu0 0.0
  %1199 = vmatpush1.msra.mxu0 0.0
  %1200 = vmatprep.subr.mxu0 0.0
  %1201 = vmatpush1.msra.mxu0 0.0
  %1202 = vmatprep.subr.mxu0 0.0
  %1203 = vmatpush1.msra.mxu0 0.0
  %1204 = vmatprep.mubr.f32.mxu0 0.0
  %1205 = vmatmul.mubr.f32.gmra.mrb[0].mxu0 %v1060
  %v1206 = vpop.f32.mrb[0].mxu0
  %v1207 = vadd.f32 %v1139, %v1206
  %v1208 = vpop.f32.mrb[0].mxu0
  %1209 = vdwg.mxu0
  %s1210 = scalar_lea.vmem %s6, 8
  %1211 = vst.msk [vmem:[%s1210] sm:$0xff] %vm1132, %v1207
  %v1212 = vmul.f32 %v1046, 0.125
  %v1213 = vlaneseq
  %v1214 = vshrl.u32 %v1213, 7
  %v1215 = vsub.s32 0, %v1214
  %v1216 = vrot.slane %v1212, %v1215
  %v1217 = vmul.f32 %v1051, %v1216
  %1218 = vmatprep.subr.mxu0 0.0
  %1219 = vmatpush1.msra.mxu0 %v1034
  %1220 = vmatprep.subr.mxu0 0.0
  %1221 = vmatpush1.msra.mxu0 %v1035
  %1222 = vmatprep.subr.mxu0 0.0
  %1223 = vmatpush1.msra.mxu0 %v1036
  %1224 = vmatprep.subr.mxu0 0.0
  %1225 = vmatpush1.msra.mxu0 %v1037
  %1226 = vmatprep.subr.mxu0 0.0
  %1227 = vmatpush1.msra.mxu0 0.0
  %1228 = vmatprep.subr.mxu0 0.0
  %1229 = vmatpush1.msra.mxu0 0.0
  %1230 = vmatprep.subr.mxu0 0.0
  %1231 = vmatpush1.msra.mxu0 0.0
  %1232 = vmatprep.subr.mxu0 0.0
  %1233 = vmatpush1.msra.mxu0 0.0
  %1234 = vmatprep.subr.mxu0 0.0
  %1235 = vmatpush1.msra.mxu0 0.0
  %1236 = vmatprep.subr.mxu0 0.0
  %1237 = vmatpush1.msra.mxu0 0.0
  %1238 = vmatprep.subr.mxu0 0.0
  %1239 = vmatpush1.msra.mxu0 0.0
  %1240 = vmatprep.subr.mxu0 0.0
  %1241 = vmatpush1.msra.mxu0 0.0
  %1242 = vmatprep.subr.mxu0 0.0
  %1243 = vmatpush1.msra.mxu0 0.0
  %1244 = vmatprep.subr.mxu0 0.0
  %1245 = vmatpush1.msra.mxu0 0.0
  %1246 = vmatprep.subr.mxu0 0.0
  %1247 = vmatpush1.msra.mxu0 0.0
  %1248 = vmatprep.subr.mxu0 0.0
  %1249 = vmatpush1.msra.mxu0 0.0
  %1250 = vmatprep.subr.mxu0 0.0
  %1251 = vmatpush1.msra.mxu0 0.0
  %1252 = vmatprep.subr.mxu0 0.0
  %1253 = vmatpush1.msra.mxu0 0.0
  %1254 = vmatprep.subr.mxu0 0.0
  %1255 = vmatpush1.msra.mxu0 0.0
  %1256 = vmatprep.subr.mxu0 0.0
  %1257 = vmatpush1.msra.mxu0 0.0
  %1258 = vmatprep.subr.mxu0 0.0
  %1259 = vmatpush1.msra.mxu0 0.0
  %1260 = vmatprep.subr.mxu0 0.0
  %1261 = vmatpush1.msra.mxu0 0.0
  %1262 = vmatprep.subr.mxu0 0.0
  %1263 = vmatpush1.msra.mxu0 0.0
  %1264 = vmatprep.subr.mxu0 0.0
  %1265 = vmatpush1.msra.mxu0 0.0
  %1266 = vmatprep.subr.mxu0 0.0
  %1267 = vmatpush1.msra.mxu0 0.0
  %1268 = vmatprep.subr.mxu0 0.0
  %1269 = vmatpush1.msra.mxu0 0.0
  %1270 = vmatprep.subr.mxu0 0.0
  %1271 = vmatpush1.msra.mxu0 0.0
  %1272 = vmatprep.subr.mxu0 0.0
  %1273 = vmatpush1.msra.mxu0 0.0
  %1274 = vmatprep.subr.mxu0 0.0
  %1275 = vmatpush1.msra.mxu0 0.0
  %1276 = vmatprep.subr.mxu0 0.0
  %1277 = vmatpush1.msra.mxu0 0.0
  %1278 = vmatprep.subr.mxu0 0.0
  %1279 = vmatpush1.msra.mxu0 0.0
  %1280 = vmatprep.subr.mxu0 0.0
  %1281 = vmatpush1.msra.mxu0 0.0
  %1282 = vmatprep.mubr.f32.mxu0 0.0
  %1283 = vmatmul.mubr.f32.gmra.mrb[0].mxu0 %v1060
  %v1284 = vpop.f32.mrb[0].mxu0
  %v1285 = vadd.f32 %v1217, %v1284
  %v1286 = vpop.f32.mrb[0].mxu0
  %1287 = vdwg.mxu0
  %s1288 = scalar_lea.vmem %s6, 16
  %1289 = vst.msk [vmem:[%s1288] sm:$0xff] %vm1132, %v1285
  // Predicated region
  $region26: #{tpu_custom_call.1} parent=0 // pred_check
    _
  $region27: #{tpu_custom_call.1} parent=0 // pred_check_branch
    %1291 = sbr.rel (0) target = $region29
  $region28: #{tpu_custom_call.1} parent=0 // pred_region
    _
  $region29: #{tpu_custom_call.1} parent=0 // pred_fallthru
    _
  // Predicated region
  $region30: #{tpu_custom_call.1} parent=0 // pred_check
    _
  $region31: #{tpu_custom_call.1} parent=0 // pred_check_branch
    %1293 = sbr.rel (0) target = $region33
  $region32: #{tpu_custom_call.1} parent=0 // pred_region
    _
  $region33: #{tpu_custom_call.1} parent=0 // pred_fallthru
    _

</llo_original>
